<compile_context>
chip_gen: v6e
topology: v6e:2x2x1
jax: 0.10.0
libtpu: 0.0.40
codegen_flags: <defaults>
</compile_context>

<pallas_src>
import functools

import jax
import jax.numpy as jnp
from jax.experimental import pallas as pl
from jax.experimental.pallas import tpu as pltpu

EPS = 1e-5


# ---------------- in-kernel helpers ----------------------------------------------------
def _lane_fold(y, width):
    """Sum 128-wide lane chunks of y (rows, width) -> (rows, 128). width % 128 == 0. Pure VPU."""
    acc = y[:, 0:128]
    for j in range(1, width // 128):
        acc = acc + y[:, j * 128:(j + 1) * 128]
    return acc


def _conv3(w_ref, x, n_out):
    """k=3 'valid' conv as 3 shifted-slice matmuls. w_ref: (3, M, K) block-diag taps, x: (K, >=n_out+2)."""
    y = jnp.dot(w_ref[0], x[:, 0:n_out], preferred_element_type=jnp.float32)
    y = y + jnp.dot(w_ref[1], x[:, 1:n_out + 1], preferred_element_type=jnp.float32)
    y = y + jnp.dot(w_ref[2], x[:, 2:n_out + 2], preferred_element_type=jnp.float32)
    return y


def _accumulate_stats(y, sum_ref, sq_ref, *, T, G, tail, first):
    """Accumulate per-row sum / sum-of-squares of y (rows, T) into lane-wide accumulators."""
    i = pl.program_id(1)

    @pl.when(first)
    def _():
        sum_ref[...] = jnp.zeros_like(sum_ref)
        sq_ref[...] = jnp.zeros_like(sq_ref)

    @pl.when(i < G - 1)                       # fast path: no masking on interior tiles
    def _():
        sum_ref[...] += _lane_fold(y, T)
        sq_ref[...] += _lane_fold(y * y, T)

    @pl.when(i == G - 1)                      # last tile: exclude padded tail from the statistics
    def _():
        lane = jax.lax.broadcasted_iota(jnp.int32, (1, T), 1)
        ym = jnp.where(lane < tail, y, 0.0)
        sum_ref[...] += _lane_fold(ym, T)
        sq_ref[...] += _lane_fold(ym * ym, T)


# ---------------- pass 1: pool + conv1, accumulate BN1 statistics ----------------------
def pass1_kernel(xm_ref, xh_ref, w1_ref, sum_ref, sq_ref, *, T, G, tail):
    nb, i = pl.program_id(0), pl.program_id(1)
    xw = jnp.concatenate([xm_ref[0], xh_ref[0]], axis=-1)   # (2, B*Cin, T+128) aligned lane concat
    xp = jnp.maximum(xw[0], xw[1])                           # MaxPool1d(2): VPU max of even/odd slabs
    y1 = _conv3(w1_ref, xp, T)                               # (B*Cout, T)
    _accumulate_stats(y1, sum_ref, sq_ref, T=T, G=G, tail=tail,
                      first=jnp.logical_and(nb == 0, i == 0))


# ---------------- pass 2: pool + conv1 + BN1/ReLU + conv2, write y2, BN2 stats ---------
def pass2_kernel(xm_ref, xh_ref, w1_ref, aff1_ref, w2_ref,
                 y2_ref, sum_ref, sq_ref, *, T, G, tail):
    nb, i = pl.program_id(0), pl.program_id(1)
    xw = jnp.concatenate([xm_ref[0], xh_ref[0]], axis=-1)
    xp = jnp.maximum(xw[0], xw[1])                           # (B*Cin, T+128)
    y1 = _conv3(w1_ref, xp, T + 2)                           # conv1 extent needed by conv2
    h1 = jnp.maximum(y1 * aff1_ref[0] + aff1_ref[1], 0.0)    # BN1 affine + ReLU, (B*Cout, T+2)
    y2 = _conv3(w2_ref, h1, T)                               # (B*Cout, T)
    y2_ref[0] = y2                                           # lane-dense store (T multiple of 128)
    _accumulate_stats(y2, sum_ref, sq_ref, T=T, G=G, tail=tail,
                      first=jnp.logical_and(nb == 0, i == 0))


# ---------------- wrapper ----------------------------------------------------------------
def down_scale(x, params):
    """x: (N, Cin, L) f32 -> (N, Cout, L//2 - 4) f32 (PyTorch Down_Scale forward, train-mode BN)."""
    N, Cin, L = x.shape
    w1, g1, be1 = params["w1"], params["g1"], params["be1"]
    w2, g2, be2 = params["w2"], params["g2"], params["be2"]
    Cout = w1.shape[0]
    Lp = L // 2                      # MaxPool1d(2) floors
    Lout1, Lout2 = Lp - 2, Lp - 4
    if Lout2 < 1:
        raise ValueError("input length too short for Down_Scale (need L//2 > 4)")

    f32 = jnp.float32
    x = x.astype(f32)

    # lane-dense length tile (multiple of 128, up to 2048) and batch-fold factor
    T = 128 * max(1, min(16, pl.cdiv(Lout1, 128)))
    G1 = pl.cdiv(Lout1, T)
    G2 = pl.cdiv(Lout2, T)
    B = 1                            # batch elements folded per block (block-diag taps stay tiny)
    for d in (8, 4, 2):
        if N % d == 0 and d * Cout <= 64 and d * Cin <= 64:
            B = d
            break
    NB = N // B
    BCin, BCout = B * Cin, B * Cout
    Tb = T // 128
    Lpad = G1 * T + 128              # +128 so the halo view of the last tile stays in-bounds

    # -- pack pooled-precursor data ONCE: (NB, 2[even/odd], B*Cin, Lpad). One HBM repack of input
    #    size; no overlapping-window duplication, no per-tile gather.
    x_ev = x[:, :, 0:2 * Lp:2]
    x_od = x[:, :, 1:2 * Lp:2]
    xs = jnp.stack([x_ev, x_od], axis=1)                                  # (N, 2, Cin, Lp)
    xs = jnp.pad(xs, ((0, 0), (0, 0), (0, 0), (0, Lpad - Lp)))
    xpk = jnp.transpose(xs.reshape(NB, B, 2, Cin, Lpad),
                        (0, 2, 1, 3, 4)).reshape(NB, 2, BCin, Lpad)

    # -- block-diagonal (batch-folded) conv taps: one (B*Cout, B*Cin) matrix per tap k
    eyeB = jnp.eye(B, dtype=f32)
    w1t = jnp.transpose(w1, (2, 0, 1)).astype(f32)                        # (3, Cout, Cin)
    w2t = jnp.transpose(w2, (2, 0, 1)).astype(f32)                        # (3, Cout, Cout)
    w1bd = jnp.stack([jnp.kron(eyeB, w1t[k]) for k in range(3)])          # (3, BCout, BCin)
    w2bd = jnp.stack([jnp.kron(eyeB, w2t[k]) for k in range(3)])          # (3, BCout, BCout)

    main_spec = pl.BlockSpec((1, 2, BCin, T), lambda nb, i: (nb, 0, 0, i))
    halo_spec = pl.BlockSpec((1, 2, BCin, 128), lambda nb, i: (nb, 0, 0, (i + 1) * Tb))
    w1_spec = pl.BlockSpec((3, BCout, BCin), lambda nb, i: (0, 0, 0))
    w2_spec = pl.BlockSpec((3, BCout, BCout), lambda nb, i: (0, 0, 0))
    aff_spec = pl.BlockSpec((2, BCout, 1), lambda nb, i: (0, 0, 0))
    stat_spec = pl.BlockSpec((BCout, 128), lambda nb, i: (0, 0))
    cparams = pltpu.CompilerParams(dimension_semantics=("arbitrary", "arbitrary"),
                                   vmem_limit_bytes=32 * 1024 * 1024)

    # ---------------- pass 1: BN1 statistics ---------------------------------------------
    tail1 = Lout1 - (G1 - 1) * T
    sum1, sq1 = pl.pallas_call(
        functools.partial(pass1_kernel, T=T, G=G1, tail=tail1),
        grid=(NB, G1),
        in_specs=[main_spec, halo_spec, w1_spec],
        out_specs=(stat_spec, stat_spec),
        out_shape=(jax.ShapeDtypeStruct((BCout, 128), f32),
                   jax.ShapeDtypeStruct((BCout, 128), f32)),
        compiler_params=cparams,
    )(xpk, xpk, w1bd)

    # NOTE: E[x^2]-E[x]^2 in f32 with a >=0 clamp; fine at these scales (see review concern).
    cnt1 = float(N * Lout1)
    mean1 = sum1.reshape(B, Cout, 128).sum(axis=(0, 2)) / cnt1
    var1 = jnp.maximum(sq1.reshape(B, Cout, 128).sum(axis=(0, 2)) / cnt1 - mean1 * mean1, 0.0)
    scale1 = g1 * jax.lax.rsqrt(var1 + EPS)
    shift1 = be1 - mean1 * scale1
    aff1 = jnp.stack([jnp.tile(scale1, B), jnp.tile(shift1, B)])[:, :, None]   # (2, BCout, 1)

    # ---------------- pass 2: conv path + BN2 statistics ---------------------------------
    tail2 = Lout2 - (G2 - 1) * T
    y2raw, sum2, sq2 = pl.pallas_call(
        functools.partial(pass2_kernel, T=T, G=G2, tail=tail2),
        grid=(NB, G2),
        in_specs=[main_spec, halo_spec, w1_spec, aff_spec, w2_spec],
        out_specs=(pl.BlockSpec((1, BCout, T), lambda nb, i: (nb, 0, i)),
                   stat_spec, stat_spec),
        out_shape=(jax.ShapeDtypeStruct((NB, BCout, G2 * T), f32),
                   jax.ShapeDtypeStruct((BCout, 128), f32),
                   jax.ShapeDtypeStruct((BCout, 128), f32)),
        compiler_params=cparams,
    )(xpk, xpk, w1bd, aff1, w2bd)

    cnt2 = float(N * Lout2)
    mean2 = sum2.reshape(B, Cout, 128).sum(axis=(0, 2)) / cnt2
    var2 = jnp.maximum(sq2.reshape(B, Cout, 128).sum(axis=(0, 2)) / cnt2 - mean2 * mean2, 0.0)
    scale2 = g2 * jax.lax.rsqrt(var2 + EPS)
    shift2 = be2 - mean2 * scale2

    # ---------------- fused epilogue (ex-pass 3): BN2 affine + ReLU + trim ----------------
    y2 = y2raw.reshape(N, Cout, G2 * T)[:, :, :Lout2]
    return jnp.maximum(y2 * scale2[None, :, None] + shift2[None, :, None], 0.0)


# ---------------- deterministic parameter init (PyTorch-style ranges) --------------------
def init_params(key, cin, cout):
    k0, k1, k2, k3 = jax.random.split(key, 4)
    bound1 = 1.0 / float(cin * 3) ** 0.5
    bound2 = 1.0 / float(cout * 3) ** 0.5
    return dict(
        w1=jax.random.uniform(k0, (cout, cin, 3), jnp.float32, -bound1, bound1),
        b1=jax.random.uniform(k1, (cout,), jnp.float32, -bound1, bound1),
        g1=jnp.ones((cout,), jnp.float32),
        be1=jnp.zeros((cout,), jnp.float32),
        w2=jax.random.uniform(k2, (cout, cout, 3), jnp.float32, -bound2, bound2),
        b2=jax.random.uniform(k3, (cout,), jnp.float32, -bound2, bound2),
        g2=jnp.ones((cout,), jnp.float32),
        be2=jnp.zeros((cout,), jnp.float32),
    )


# ---------------- pure-JAX reference (keeps the biases; proves they cancel) --------------
def ref_forward(x, p):
    N, Cin, L = x.shape
    Lp = L // 2
    xp = jnp.max(x[:, :, :2 * Lp].reshape(N, Cin, Lp, 2), axis=-1)

    def conv(inp, w, b):
        y = jax.lax.conv_general_dilated(
            inp, w, window_strides=(1,), padding="VALID",
            dimension_numbers=("NCH", "OIH", "NCH"))
        return y + b[None, :, None]

    def bn_relu(y, g, be):
        mean = jnp.mean(y, axis=(0, 2), keepdims=True)
        var = jnp.mean(jnp.square(y - mean), axis=(0, 2), keepdims=True)
        yhat = (y - mean) / jnp.sqrt(var + EPS)
        return jnp.maximum(yhat * g[None, :, None] + be[None, :, None], 0.0)

    h = bn_relu(conv(xp, p["w1"], p["b1"]), p["g1"], p["be1"])
    h = bn_relu(conv(h, p["w2"], p["b2"]), p["g2"], p["be2"])
    return h


if __name__ == "__main__":
    key = jax.random.PRNGKey(0)
    kx, kp = jax.random.split(key)
    N, Cin, Cout, L = 2, 4, 8, 16
    x = jax.random.normal(kx, (N, Cin, L), dtype=jnp.float32)
    params = init_params(kp, Cin, Cout)

    out = jax.jit(down_scale)(x, params)
    out = jax.block_until_ready(out)

    ref = ref_forward(x, params)
    assert out.shape == (N, Cout, L // 2 - 4), out.shape
    assert jnp.allclose(out, ref, atol=1e-3, rtol=1e-3), "mismatch vs reference"
    print("KERNEL_OK")
</pallas_src>

<mosaic_0001>
module attributes {stable_mosaic.version = 11 : i64} {
  func.func @pass1_kernel(%arg0: i32, %arg1: i32, %arg2: memref<1x2x8x128xf32, #tpu.memory_space<vmem>>, %arg3: memref<1x2x8x128xf32, #tpu.memory_space<vmem>>, %arg4: memref<3x16x8xf32, #tpu.memory_space<vmem>>, %arg5: memref<16x128xf32, #tpu.memory_space<vmem>>, %arg6: memref<16x128xf32, #tpu.memory_space<vmem>>) attributes {dimension_semantics = [#tpu.dimension_semantics<arbitrary>, #tpu.dimension_semantics<arbitrary>], iteration_bounds = array<i64: 1, 1>, scalar_prefetch = 0 : i64, scratch_operands = 0 : i64, tpu.core_type = #tpu.core_type<tc>, window_params = [{transform_indices = @transform_0, window_bounds = array<i64: 1, 2, 8, 128>}, {transform_indices = @transform_1, window_bounds = array<i64: 1, 2, 8, 128>}, {pipeline_mode = #tpu.pipeline_mode<synchronous>, transform_indices = @transform_2, window_bounds = array<i64: 3, 16, 8>}, {pipeline_mode = #tpu.pipeline_mode<synchronous>, transform_indices = @transform_3, window_bounds = array<i64: 16, 128>}, {pipeline_mode = #tpu.pipeline_mode<synchronous>, transform_indices = @transform_4, window_bounds = array<i64: 16, 128>}]} {
    %c0 = arith.constant 0 : index
    %c0_0 = arith.constant 0 : index
    %c0_1 = arith.constant 0 : index
    %c0_2 = arith.constant 0 : index
    %0 = vector.load %arg2[%c0, %c0_0, %c0_1, %c0_2] : memref<1x2x8x128xf32, #tpu.memory_space<vmem>>, vector<1x2x8x128xf32>
    %1 = vector.shape_cast %0 : vector<1x2x8x128xf32> to vector<2x8x128xf32>
    %c0_3 = arith.constant 0 : index
    %c0_4 = arith.constant 0 : index
    %c0_5 = arith.constant 0 : index
    %c0_6 = arith.constant 0 : index
    %2 = vector.load %arg3[%c0_3, %c0_4, %c0_5, %c0_6] : memref<1x2x8x128xf32, #tpu.memory_space<vmem>>, vector<1x2x8x128xf32>
    %3 = vector.shape_cast %2 : vector<1x2x8x128xf32> to vector<2x8x128xf32>
    %4 = tpu.concatenate %1, %3 in 2 : vector<2x8x128xf32>, vector<2x8x128xf32> -> vector<2x8x256xf32>
    %5 = vector.extract_strided_slice %4 {offsets = [0, 0, 0], sizes = [1, 8, 256], strides = [1, 1, 1]} : vector<2x8x256xf32> to vector<1x8x256xf32>
    %6 = vector.shape_cast %5 : vector<1x8x256xf32> to vector<8x256xf32>
    %7 = vector.extract_strided_slice %4 {offsets = [1, 0, 0], sizes = [1, 8, 256], strides = [1, 1, 1]} : vector<2x8x256xf32> to vector<1x8x256xf32>
    %8 = vector.shape_cast %7 : vector<1x8x256xf32> to vector<8x256xf32>
    %9 = arith.maximumf %6, %8 : vector<8x256xf32>
    %c0_7 = arith.constant 0 : index
    %c0_8 = arith.constant 0 : index
    %c0_9 = arith.constant 0 : index
    %10 = vector.load %arg4[%c0_7, %c0_8, %c0_9] : memref<3x16x8xf32, #tpu.memory_space<vmem>>, vector<1x16x8xf32>
    %11 = vector.shape_cast %10 : vector<1x16x8xf32> to vector<16x8xf32>
    %12 = vector.extract_strided_slice %9 {offsets = [0, 0], sizes = [8, 128], strides = [1, 1]} : vector<8x256xf32> to vector<8x128xf32>
    %cst = arith.constant dense<0.000000e+00> : vector<16x128xf32>
    %13 = tpu.matmul %11, %12, %cst {dimension_numbers = #tpu.dot_dimension_numbers<[1], [0], [0], [1], [0, 0, 1, 1], [], []>} : vector<16x8xf32>, vector<8x128xf32>, vector<16x128xf32> -> vector<16x128xf32>
    %c1 = arith.constant 1 : index
    %c0_10 = arith.constant 0 : index
    %c0_11 = arith.constant 0 : index
    %14 = vector.load %arg4[%c1, %c0_10, %c0_11] : memref<3x16x8xf32, #tpu.memory_space<vmem>>, vector<1x16x8xf32>
    %15 = vector.shape_cast %14 : vector<1x16x8xf32> to vector<16x8xf32>
    %16 = vector.extract_strided_slice %9 {offsets = [0, 1], sizes = [8, 128], strides = [1, 1]} : vector<8x256xf32> to vector<8x128xf32>
    %cst_12 = arith.constant dense<0.000000e+00> : vector<16x128xf32>
    %17 = tpu.matmul %15, %16, %cst_12 {dimension_numbers = #tpu.dot_dimension_numbers<[1], [0], [0], [1], [0, 0, 1, 1], [], []>} : vector<16x8xf32>, vector<8x128xf32>, vector<16x128xf32> -> vector<16x128xf32>
    %18 = arith.addf %13, %17 : vector<16x128xf32>
    %c2 = arith.constant 2 : index
    %c0_13 = arith.constant 0 : index
    %c0_14 = arith.constant 0 : index
    %19 = vector.load %arg4[%c2, %c0_13, %c0_14] : memref<3x16x8xf32, #tpu.memory_space<vmem>>, vector<1x16x8xf32>
    %20 = vector.shape_cast %19 : vector<1x16x8xf32> to vector<16x8xf32>
    %21 = vector.extract_strided_slice %9 {offsets = [0, 2], sizes = [8, 128], strides = [1, 1]} : vector<8x256xf32> to vector<8x128xf32>
    %cst_15 = arith.constant dense<0.000000e+00> : vector<16x128xf32>
    %22 = tpu.matmul %20, %21, %cst_15 {dimension_numbers = #tpu.dot_dimension_numbers<[1], [0], [0], [1], [0, 0, 1, 1], [], []>} : vector<16x8xf32>, vector<8x128xf32>, vector<16x128xf32> -> vector<16x128xf32>
    %23 = arith.addf %18, %22 : vector<16x128xf32>
    %c0_i32 = arith.constant 0 : i32
    %24 = arith.cmpi eq, %arg0, %c0_i32 : i32
    %c0_i32_16 = arith.constant 0 : i32
    %25 = arith.cmpi eq, %arg1, %c0_i32_16 : i32
    %26 = arith.andi %24, %25 : i1
    %27 = arith.extui %26 : i1 to i32
    %c0_i32_17 = arith.constant 0 : i32
    %28 = arith.cmpi ne, %27, %c0_i32_17 : i32
    scf.if %28 {
      %cst_22 = arith.constant 0.000000e+00 : f32
      %35 = vector.broadcast %cst_22 : f32 to vector<16x128xf32>
      %c0_23 = arith.constant 0 : index
      %c0_24 = arith.constant 0 : index
      %36 = vector.load %arg5[%c0_23, %c0_24] : memref<16x128xf32, #tpu.memory_space<vmem>>, vector<16x128xf32>
      tpu.vector_store %arg5[%c0_23, %c0_24], %35 {strides = array<i32>} : memref<16x128xf32, #tpu.memory_space<vmem>>, vector<16x128xf32>,
      %cst_25 = arith.constant 0.000000e+00 : f32
      %37 = vector.broadcast %cst_25 : f32 to vector<16x128xf32>
      %c0_26 = arith.constant 0 : index
      %c0_27 = arith.constant 0 : index
      %38 = vector.load %arg6[%c0_26, %c0_27] : memref<16x128xf32, #tpu.memory_space<vmem>>, vector<16x128xf32>
      tpu.vector_store %arg6[%c0_26, %c0_27], %37 {strides = array<i32>} : memref<16x128xf32, #tpu.memory_space<vmem>>, vector<16x128xf32>,
    } else {
    }
    %c0_i32_18 = arith.constant 0 : i32
    %29 = arith.cmpi slt, %arg1, %c0_i32_18 : i32
    %30 = arith.extui %29 : i1 to i32
    %c0_i32_19 = arith.constant 0 : i32
    %31 = arith.cmpi ne, %30, %c0_i32_19 : i32
    scf.if %31 {
      %c0_22 = arith.constant 0 : index
      %c0_23 = arith.constant 0 : index
      %35 = vector.load %arg5[%c0_22, %c0_23] : memref<16x128xf32, #tpu.memory_space<vmem>>, vector<16x128xf32>
      %36 = arith.addf %35, %23 : vector<16x128xf32>
      %c0_24 = arith.constant 0 : index
      %c0_25 = arith.constant 0 : index
      %37 = vector.load %arg5[%c0_24, %c0_25] : memref<16x128xf32, #tpu.memory_space<vmem>>, vector<16x128xf32>
      tpu.vector_store %arg5[%c0_24, %c0_25], %36 {strides = array<i32>} : memref<16x128xf32, #tpu.memory_space<vmem>>, vector<16x128xf32>,
      %c0_26 = arith.constant 0 : index
      %c0_27 = arith.constant 0 : index
      %38 = vector.load %arg6[%c0_26, %c0_27] : memref<16x128xf32, #tpu.memory_space<vmem>>, vector<16x128xf32>
      %39 = arith.mulf %23, %23 : vector<16x128xf32>
      %40 = arith.addf %38, %39 : vector<16x128xf32>
      %c0_28 = arith.constant 0 : index
      %c0_29 = arith.constant 0 : index
      %41 = vector.load %arg6[%c0_28, %c0_29] : memref<16x128xf32, #tpu.memory_space<vmem>>, vector<16x128xf32>
      tpu.vector_store %arg6[%c0_28, %c0_29], %40 {strides = array<i32>} : memref<16x128xf32, #tpu.memory_space<vmem>>, vector<16x128xf32>,
    } else {
    }
    %c0_i32_20 = arith.constant 0 : i32
    %32 = arith.cmpi eq, %arg1, %c0_i32_20 : i32
    %33 = arith.extui %32 : i1 to i32
    %c0_i32_21 = arith.constant 0 : i32
    %34 = arith.cmpi ne, %33, %c0_i32_21 : i32
    scf.if %34 {
      %35 = tpu.iota {dimensions = array<i32: 1>} : vector<1x128xi32>
      %c6_i32 = arith.constant 6 : i32
      %36 = vector.broadcast %c6_i32 : i32 to vector<1x128xi32>
      %37 = arith.cmpi slt, %35, %36 : vector<1x128xi32>
      %cst_22 = arith.constant 0.000000e+00 : f32
      %38 = vector.shape_cast %37 : vector<1x128xi1> to vector<1x128xi1>
      %39 = vector.broadcast %38 : vector<1x128xi1> to vector<16x128xi1>
      %40 = vector.broadcast %cst_22 : f32 to vector<16x128xf32>
      %41 = arith.select %39, %23, %40 : vector<16x128xi1>, vector<16x128xf32>
      %c0_23 = arith.constant 0 : index
      %c0_24 = arith.constant 0 : index
      %42 = vector.load %arg5[%c0_23, %c0_24] : memref<16x128xf32, #tpu.memory_space<vmem>>, vector<16x128xf32>
      %43 = arith.addf %42, %41 : vector<16x128xf32>
      %c0_25 = arith.constant 0 : index
      %c0_26 = arith.constant 0 : index
      %44 = vector.load %arg5[%c0_25, %c0_26] : memref<16x128xf32, #tpu.memory_space<vmem>>, vector<16x128xf32>
      tpu.vector_store %arg5[%c0_25, %c0_26], %43 {strides = array<i32>} : memref<16x128xf32, #tpu.memory_space<vmem>>, vector<16x128xf32>,
      %c0_27 = arith.constant 0 : index
      %c0_28 = arith.constant 0 : index
      %45 = vector.load %arg6[%c0_27, %c0_28] : memref<16x128xf32, #tpu.memory_space<vmem>>, vector<16x128xf32>
      %46 = arith.mulf %41, %41 : vector<16x128xf32>
      %47 = arith.addf %45, %46 : vector<16x128xf32>
      %c0_29 = arith.constant 0 : index
      %c0_30 = arith.constant 0 : index
      %48 = vector.load %arg6[%c0_29, %c0_30] : memref<16x128xf32, #tpu.memory_space<vmem>>, vector<16x128xf32>
      tpu.vector_store %arg6[%c0_29, %c0_30], %47 {strides = array<i32>} : memref<16x128xf32, #tpu.memory_space<vmem>>, vector<16x128xf32>,
    } else {
    }
    return
  }
  func.func @transform_0(%arg0: i32, %arg1: i32) -> (i32, i32, i32, i32) {
    %c0_i32 = arith.constant 0 : i32
    %c0_i32_0 = arith.constant 0 : i32
    %c0_i32_1 = arith.constant 0 : i32
    return %arg0, %c0_i32, %c0_i32_0, %arg1 : i32, i32, i32, i32
  }
  func.func @transform_1(%arg0: i32, %arg1: i32) -> (i32, i32, i32, i32) {
    %c1_i32 = arith.constant 1 : i32
    %0 = arith.addi %arg1, %c1_i32 : i32
    %c1_i32_0 = arith.constant 1 : i32
    %1 = arith.muli %0, %c1_i32_0 : i32
    %c0_i32 = arith.constant 0 : i32
    %c0_i32_1 = arith.constant 0 : i32
    %c0_i32_2 = arith.constant 0 : i32
    return %arg0, %c0_i32, %c0_i32_1, %1 : i32, i32, i32, i32
  }
  func.func @transform_2(%arg0: i32, %arg1: i32) -> (i32, i32, i32) {
    %c0_i32 = arith.constant 0 : i32
    %c0_i32_0 = arith.constant 0 : i32
    %c0_i32_1 = arith.constant 0 : i32
    %c0_i32_2 = arith.constant 0 : i32
    return %c0_i32, %c0_i32_0, %c0_i32_1 : i32, i32, i32
  }
  func.func @transform_3(%arg0: i32, %arg1: i32) -> (i32, i32) {
    %c0_i32 = arith.constant 0 : i32
    %c0_i32_0 = arith.constant 0 : i32
    %c0_i32_1 = arith.constant 0 : i32
    return %c0_i32, %c0_i32_0 : i32, i32
  }
  func.func @transform_4(%arg0: i32, %arg1: i32) -> (i32, i32) {
    %c0_i32 = arith.constant 0 : i32
    %c0_i32_0 = arith.constant 0 : i32
    %c0_i32_1 = arith.constant 0 : i32
    return %c0_i32, %c0_i32_0 : i32, i32
  }
}

module attributes {stable_mosaic.version = 11 : i64} {
  func.func @pass2_kernel(%arg0: i32, %arg1: i32, %arg2: memref<1x2x8x128xf32, #tpu.memory_space<vmem>>, %arg3: memref<1x2x8x128xf32, #tpu.memory_space<vmem>>, %arg4: memref<3x16x8xf32, #tpu.memory_space<vmem>>, %arg5: memref<2x16x1xf32, #tpu.memory_space<vmem>>, %arg6: memref<3x16x16xf32, #tpu.memory_space<vmem>>, %arg7: memref<1x16x128xf32, #tpu.memory_space<vmem>>, %arg8: memref<16x128xf32, #tpu.memory_space<vmem>>, %arg9: memref<16x128xf32, #tpu.memory_space<vmem>>) attributes {dimension_semantics = [#tpu.dimension_semantics<arbitrary>, #tpu.dimension_semantics<arbitrary>], iteration_bounds = array<i64: 1, 1>, scalar_prefetch = 0 : i64, scratch_operands = 0 : i64, tpu.core_type = #tpu.core_type<tc>, window_params = [{transform_indices = @transform_0, window_bounds = array<i64: 1, 2, 8, 128>}, {transform_indices = @transform_1, window_bounds = array<i64: 1, 2, 8, 128>}, {pipeline_mode = #tpu.pipeline_mode<synchronous>, transform_indices = @transform_2, window_bounds = array<i64: 3, 16, 8>}, {pipeline_mode = #tpu.pipeline_mode<synchronous>, transform_indices = @transform_3, window_bounds = array<i64: 2, 16, 1>}, {pipeline_mode = #tpu.pipeline_mode<synchronous>, transform_indices = @transform_4, window_bounds = array<i64: 3, 16, 16>}, {transform_indices = @transform_5, window_bounds = array<i64: 1, 16, 128>}, {pipeline_mode = #tpu.pipeline_mode<synchronous>, transform_indices = @transform_6, window_bounds = array<i64: 16, 128>}, {pipeline_mode = #tpu.pipeline_mode<synchronous>, transform_indices = @transform_7, window_bounds = array<i64: 16, 128>}]} {
    %c0 = arith.constant 0 : index
    %c0_0 = arith.constant 0 : index
    %c0_1 = arith.constant 0 : index
    %c0_2 = arith.constant 0 : index
    %0 = vector.load %arg2[%c0, %c0_0, %c0_1, %c0_2] : memref<1x2x8x128xf32, #tpu.memory_space<vmem>>, vector<1x2x8x128xf32>
    %1 = vector.shape_cast %0 : vector<1x2x8x128xf32> to vector<2x8x128xf32>
    %c0_3 = arith.constant 0 : index
    %c0_4 = arith.constant 0 : index
    %c0_5 = arith.constant 0 : index
    %c0_6 = arith.constant 0 : index
    %2 = vector.load %arg3[%c0_3, %c0_4, %c0_5, %c0_6] : memref<1x2x8x128xf32, #tpu.memory_space<vmem>>, vector<1x2x8x128xf32>
    %3 = vector.shape_cast %2 : vector<1x2x8x128xf32> to vector<2x8x128xf32>
    %4 = tpu.concatenate %1, %3 in 2 : vector<2x8x128xf32>, vector<2x8x128xf32> -> vector<2x8x256xf32>
    %5 = vector.extract_strided_slice %4 {offsets = [0, 0, 0], sizes = [1, 8, 256], strides = [1, 1, 1]} : vector<2x8x256xf32> to vector<1x8x256xf32>
    %6 = vector.shape_cast %5 : vector<1x8x256xf32> to vector<8x256xf32>
    %7 = vector.extract_strided_slice %4 {offsets = [1, 0, 0], sizes = [1, 8, 256], strides = [1, 1, 1]} : vector<2x8x256xf32> to vector<1x8x256xf32>
    %8 = vector.shape_cast %7 : vector<1x8x256xf32> to vector<8x256xf32>
    %9 = arith.maximumf %6, %8 : vector<8x256xf32>
    %c0_7 = arith.constant 0 : index
    %c0_8 = arith.constant 0 : index
    %c0_9 = arith.constant 0 : index
    %10 = vector.load %arg4[%c0_7, %c0_8, %c0_9] : memref<3x16x8xf32, #tpu.memory_space<vmem>>, vector<1x16x8xf32>
    %11 = vector.shape_cast %10 : vector<1x16x8xf32> to vector<16x8xf32>
    %12 = vector.extract_strided_slice %9 {offsets = [0, 0], sizes = [8, 130], strides = [1, 1]} : vector<8x256xf32> to vector<8x130xf32>
    %cst = arith.constant dense<0.000000e+00> : vector<16x130xf32>
    %13 = tpu.matmul %11, %12, %cst {dimension_numbers = #tpu.dot_dimension_numbers<[1], [0], [0], [1], [0, 0, 1, 1], [], []>} : vector<16x8xf32>, vector<8x130xf32>, vector<16x130xf32> -> vector<16x130xf32>
    %c1 = arith.constant 1 : index
    %c0_10 = arith.constant 0 : index
    %c0_11 = arith.constant 0 : index
    %14 = vector.load %arg4[%c1, %c0_10, %c0_11] : memref<3x16x8xf32, #tpu.memory_space<vmem>>, vector<1x16x8xf32>
    %15 = vector.shape_cast %14 : vector<1x16x8xf32> to vector<16x8xf32>
    %16 = vector.extract_strided_slice %9 {offsets = [0, 1], sizes = [8, 130], strides = [1, 1]} : vector<8x256xf32> to vector<8x130xf32>
    %cst_12 = arith.constant dense<0.000000e+00> : vector<16x130xf32>
    %17 = tpu.matmul %15, %16, %cst_12 {dimension_numbers = #tpu.dot_dimension_numbers<[1], [0], [0], [1], [0, 0, 1, 1], [], []>} : vector<16x8xf32>, vector<8x130xf32>, vector<16x130xf32> -> vector<16x130xf32>
    %18 = arith.addf %13, %17 : vector<16x130xf32>
    %c2 = arith.constant 2 : index
    %c0_13 = arith.constant 0 : index
    %c0_14 = arith.constant 0 : index
    %19 = vector.load %arg4[%c2, %c0_13, %c0_14] : memref<3x16x8xf32, #tpu.memory_space<vmem>>, vector<1x16x8xf32>
    %20 = vector.shape_cast %19 : vector<1x16x8xf32> to vector<16x8xf32>
    %21 = vector.extract_strided_slice %9 {offsets = [0, 2], sizes = [8, 130], strides = [1, 1]} : vector<8x256xf32> to vector<8x130xf32>
    %cst_15 = arith.constant dense<0.000000e+00> : vector<16x130xf32>
    %22 = tpu.matmul %20, %21, %cst_15 {dimension_numbers = #tpu.dot_dimension_numbers<[1], [0], [0], [1], [0, 0, 1, 1], [], []>} : vector<16x8xf32>, vector<8x130xf32>, vector<16x130xf32> -> vector<16x130xf32>
    %23 = arith.addf %18, %22 : vector<16x130xf32>
    %c0_16 = arith.constant 0 : index
    %c0_17 = arith.constant 0 : index
    %c0_18 = arith.constant 0 : index
    %24 = vector.load %arg5[%c0_16, %c0_17, %c0_18] : memref<2x16x1xf32, #tpu.memory_space<vmem>>, vector<1x16x1xf32>
    %25 = vector.shape_cast %24 : vector<1x16x1xf32> to vector<16x1xf32>
    %26 = vector.broadcast %25 : vector<16x1xf32> to vector<16x130xf32>
    %27 = arith.mulf %23, %26 : vector<16x130xf32>
    %c1_19 = arith.constant 1 : index
    %c0_20 = arith.constant 0 : index
    %c0_21 = arith.constant 0 : index
    %28 = vector.load %arg5[%c1_19, %c0_20, %c0_21] : memref<2x16x1xf32, #tpu.memory_space<vmem>>, vector<1x16x1xf32>
    %29 = vector.shape_cast %28 : vector<1x16x1xf32> to vector<16x1xf32>
    %30 = vector.broadcast %29 : vector<16x1xf32> to vector<16x130xf32>
    %31 = arith.addf %27, %30 : vector<16x130xf32>
    %cst_22 = arith.constant 0.000000e+00 : f32
    %32 = vector.broadcast %cst_22 : f32 to vector<16x130xf32>
    %33 = arith.maximumf %31, %32 : vector<16x130xf32>
    %c0_23 = arith.constant 0 : index
    %c0_24 = arith.constant 0 : index
    %c0_25 = arith.constant 0 : index
    %34 = vector.load %arg6[%c0_23, %c0_24, %c0_25] : memref<3x16x16xf32, #tpu.memory_space<vmem>>, vector<1x16x16xf32>
    %35 = vector.shape_cast %34 : vector<1x16x16xf32> to vector<16x16xf32>
    %36 = vector.extract_strided_slice %33 {offsets = [0, 0], sizes = [16, 128], strides = [1, 1]} : vector<16x130xf32> to vector<16x128xf32>
    %cst_26 = arith.constant dense<0.000000e+00> : vector<16x128xf32>
    %37 = tpu.matmul %35, %36, %cst_26 {dimension_numbers = #tpu.dot_dimension_numbers<[1], [0], [0], [1], [0, 0, 1, 1], [], []>} : vector<16x16xf32>, vector<16x128xf32>, vector<16x128xf32> -> vector<16x128xf32>
    %c1_27 = arith.constant 1 : index
    %c0_28 = arith.constant 0 : index
    %c0_29 = arith.constant 0 : index
    %38 = vector.load %arg6[%c1_27, %c0_28, %c0_29] : memref<3x16x16xf32, #tpu.memory_space<vmem>>, vector<1x16x16xf32>
    %39 = vector.shape_cast %38 : vector<1x16x16xf32> to vector<16x16xf32>
    %40 = vector.extract_strided_slice %33 {offsets = [0, 1], sizes = [16, 128], strides = [1, 1]} : vector<16x130xf32> to vector<16x128xf32>
    %cst_30 = arith.constant dense<0.000000e+00> : vector<16x128xf32>
    %41 = tpu.matmul %39, %40, %cst_30 {dimension_numbers = #tpu.dot_dimension_numbers<[1], [0], [0], [1], [0, 0, 1, 1], [], []>} : vector<16x16xf32>, vector<16x128xf32>, vector<16x128xf32> -> vector<16x128xf32>
    %42 = arith.addf %37, %41 : vector<16x128xf32>
    %c2_31 = arith.constant 2 : index
    %c0_32 = arith.constant 0 : index
    %c0_33 = arith.constant 0 : index
    %43 = vector.load %arg6[%c2_31, %c0_32, %c0_33] : memref<3x16x16xf32, #tpu.memory_space<vmem>>, vector<1x16x16xf32>
    %44 = vector.shape_cast %43 : vector<1x16x16xf32> to vector<16x16xf32>
    %45 = vector.extract_strided_slice %33 {offsets = [0, 2], sizes = [16, 128], strides = [1, 1]} : vector<16x130xf32> to vector<16x128xf32>
    %cst_34 = arith.constant dense<0.000000e+00> : vector<16x128xf32>
    %46 = tpu.matmul %44, %45, %cst_34 {dimension_numbers = #tpu.dot_dimension_numbers<[1], [0], [0], [1], [0, 0, 1, 1], [], []>} : vector<16x16xf32>, vector<16x128xf32>, vector<16x128xf32> -> vector<16x128xf32>
    %47 = arith.addf %42, %46 : vector<16x128xf32>
    %c0_35 = arith.constant 0 : index
    %c0_36 = arith.constant 0 : index
    %c0_37 = arith.constant 0 : index
    %48 = vector.load %arg7[%c0_35, %c0_36, %c0_37] : memref<1x16x128xf32, #tpu.memory_space<vmem>>, vector<1x16x128xf32>
    %49 = vector.shape_cast %48 : vector<1x16x128xf32> to vector<16x128xf32>
    %50 = vector.shape_cast %47 : vector<16x128xf32> to vector<1x16x128xf32>
    tpu.vector_store %arg7[%c0_35, %c0_36, %c0_37], %50 {strides = array<i32>} : memref<1x16x128xf32, #tpu.memory_space<vmem>>, vector<1x16x128xf32>,
    %c0_i32 = arith.constant 0 : i32
    %51 = arith.cmpi eq, %arg0, %c0_i32 : i32
    %c0_i32_38 = arith.constant 0 : i32
    %52 = arith.cmpi eq, %arg1, %c0_i32_38 : i32
    %53 = arith.andi %51, %52 : i1
    %54 = arith.extui %53 : i1 to i32
    %c0_i32_39 = arith.constant 0 : i32
    %55 = arith.cmpi ne, %54, %c0_i32_39 : i32
    scf.if %55 {
      %cst_44 = arith.constant 0.000000e+00 : f32
      %62 = vector.broadcast %cst_44 : f32 to vector<16x128xf32>
      %c0_45 = arith.constant 0 : index
      %c0_46 = arith.constant 0 : index
      %63 = vector.load %arg8[%c0_45, %c0_46] : memref<16x128xf32, #tpu.memory_space<vmem>>, vector<16x128xf32>
      tpu.vector_store %arg8[%c0_45, %c0_46], %62 {strides = array<i32>} : memref<16x128xf32, #tpu.memory_space<vmem>>, vector<16x128xf32>,
      %cst_47 = arith.constant 0.000000e+00 : f32
      %64 = vector.broadcast %cst_47 : f32 to vector<16x128xf32>
      %c0_48 = arith.constant 0 : index
      %c0_49 = arith.constant 0 : index
      %65 = vector.load %arg9[%c0_48, %c0_49] : memref<16x128xf32, #tpu.memory_space<vmem>>, vector<16x128xf32>
      tpu.vector_store %arg9[%c0_48, %c0_49], %64 {strides = array<i32>} : memref<16x128xf32, #tpu.memory_space<vmem>>, vector<16x128xf32>,
    } else {
    }
    %c0_i32_40 = arith.constant 0 : i32
    %56 = arith.cmpi slt, %arg1, %c0_i32_40 : i32
    %57 = arith.extui %56 : i1 to i32
    %c0_i32_41 = arith.constant 0 : i32
    %58 = arith.cmpi ne, %57, %c0_i32_41 : i32
    scf.if %58 {
      %c0_44 = arith.constant 0 : index
      %c0_45 = arith.constant 0 : index
      %62 = vector.load %arg8[%c0_44, %c0_45] : memref<16x128xf32, #tpu.memory_space<vmem>>, vector<16x128xf32>
      %63 = arith.addf %62, %47 : vector<16x128xf32>
      %c0_46 = arith.constant 0 : index
      %c0_47 = arith.constant 0 : index
      %64 = vector.load %arg8[%c0_46, %c0_47] : memref<16x128xf32, #tpu.memory_space<vmem>>, vector<16x128xf32>
      tpu.vector_store %arg8[%c0_46, %c0_47], %63 {strides = array<i32>} : memref<16x128xf32, #tpu.memory_space<vmem>>, vector<16x128xf32>,
      %c0_48 = arith.constant 0 : index
      %c0_49 = arith.constant 0 : index
      %65 = vector.load %arg9[%c0_48, %c0_49] : memref<16x128xf32, #tpu.memory_space<vmem>>, vector<16x128xf32>
      %66 = arith.mulf %47, %47 : vector<16x128xf32>
      %67 = arith.addf %65, %66 : vector<16x128xf32>
      %c0_50 = arith.constant 0 : index
      %c0_51 = arith.constant 0 : index
      %68 = vector.load %arg9[%c0_50, %c0_51] : memref<16x128xf32, #tpu.memory_space<vmem>>, vector<16x128xf32>
      tpu.vector_store %arg9[%c0_50, %c0_51], %67 {strides = array<i32>} : memref<16x128xf32, #tpu.memory_space<vmem>>, vector<16x128xf32>,
    } else {
    }
    %c0_i32_42 = arith.constant 0 : i32
    %59 = arith.cmpi eq, %arg1, %c0_i32_42 : i32
    %60 = arith.extui %59 : i1 to i32
    %c0_i32_43 = arith.constant 0 : i32
    %61 = arith.cmpi ne, %60, %c0_i32_43 : i32
    scf.if %61 {
      %62 = tpu.iota {dimensions = array<i32: 1>} : vector<1x128xi32>
      %c4_i32 = arith.constant 4 : i32
      %63 = vector.broadcast %c4_i32 : i32 to vector<1x128xi32>
      %64 = arith.cmpi slt, %62, %63 : vector<1x128xi32>
      %cst_44 = arith.constant 0.000000e+00 : f32
      %65 = vector.shape_cast %64 : vector<1x128xi1> to vector<1x128xi1>
      %66 = vector.broadcast %65 : vector<1x128xi1> to vector<16x128xi1>
      %67 = vector.broadcast %cst_44 : f32 to vector<16x128xf32>
      %68 = arith.select %66, %47, %67 : vector<16x128xi1>, vector<16x128xf32>
      %c0_45 = arith.constant 0 : index
      %c0_46 = arith.constant 0 : index
      %69 = vector.load %arg8[%c0_45, %c0_46] : memref<16x128xf32, #tpu.memory_space<vmem>>, vector<16x128xf32>
      %70 = arith.addf %69, %68 : vector<16x128xf32>
      %c0_47 = arith.constant 0 : index
      %c0_48 = arith.constant 0 : index
      %71 = vector.load %arg8[%c0_47, %c0_48] : memref<16x128xf32, #tpu.memory_space<vmem>>, vector<16x128xf32>
      tpu.vector_store %arg8[%c0_47, %c0_48], %70 {strides = array<i32>} : memref<16x128xf32, #tpu.memory_space<vmem>>, vector<16x128xf32>,
      %c0_49 = arith.constant 0 : index
      %c0_50 = arith.constant 0 : index
      %72 = vector.load %arg9[%c0_49, %c0_50] : memref<16x128xf32, #tpu.memory_space<vmem>>, vector<16x128xf32>
      %73 = arith.mulf %68, %68 : vector<16x128xf32>
      %74 = arith.addf %72, %73 : vector<16x128xf32>
      %c0_51 = arith.constant 0 : index
      %c0_52 = arith.constant 0 : index
      %75 = vector.load %arg9[%c0_51, %c0_52] : memref<16x128xf32, #tpu.memory_space<vmem>>, vector<16x128xf32>
      tpu.vector_store %arg9[%c0_51, %c0_52], %74 {strides = array<i32>} : memref<16x128xf32, #tpu.memory_space<vmem>>, vector<16x128xf32>,
    } else {
    }
    return
  }
  func.func @transform_0(%arg0: i32, %arg1: i32) -> (i32, i32, i32, i32) {
    %c0_i32 = arith.constant 0 : i32
    %c0_i32_0 = arith.constant 0 : i32
    %c0_i32_1 = arith.constant 0 : i32
    return %arg0, %c0_i32, %c0_i32_0, %arg1 : i32, i32, i32, i32
  }
  func.func @transform_1(%arg0: i32, %arg1: i32) -> (i32, i32, i32, i32) {
    %c1_i32 = arith.constant 1 : i32
    %0 = arith.addi %arg1, %c1_i32 : i32
    %c1_i32_0 = arith.constant 1 : i32
    %1 = arith.muli %0, %c1_i32_0 : i32
    %c0_i32 = arith.constant 0 : i32
    %c0_i32_1 = arith.constant 0 : i32
    %c0_i32_2 = arith.constant 0 : i32
    return %arg0, %c0_i32, %c0_i32_1, %1 : i32, i32, i32, i32
  }
  func.func @transform_2(%arg0: i32, %arg1: i32) -> (i32, i32, i32) {
    %c0_i32 = arith.constant 0 : i32
    %c0_i32_0 = arith.constant 0 : i32
    %c0_i32_1 = arith.constant 0 : i32
    %c0_i32_2 = arith.constant 0 : i32
    return %c0_i32, %c0_i32_0, %c0_i32_1 : i32, i32, i32
  }
  func.func @transform_3(%arg0: i32, %arg1: i32) -> (i32, i32, i32) {
    %c0_i32 = arith.constant 0 : i32
    %c0_i32_0 = arith.constant 0 : i32
    %c0_i32_1 = arith.constant 0 : i32
    %c0_i32_2 = arith.constant 0 : i32
    return %c0_i32, %c0_i32_0, %c0_i32_1 : i32, i32, i32
  }
  func.func @transform_4(%arg0: i32, %arg1: i32) -> (i32, i32, i32) {
    %c0_i32 = arith.constant 0 : i32
    %c0_i32_0 = arith.constant 0 : i32
    %c0_i32_1 = arith.constant 0 : i32
    %c0_i32_2 = arith.constant 0 : i32
    return %c0_i32, %c0_i32_0, %c0_i32_1 : i32, i32, i32
  }
  func.func @transform_5(%arg0: i32, %arg1: i32) -> (i32, i32, i32) {
    %c0_i32 = arith.constant 0 : i32
    %c0_i32_0 = arith.constant 0 : i32
    return %arg0, %c0_i32, %arg1 : i32, i32, i32
  }
  func.func @transform_6(%arg0: i32, %arg1: i32) -> (i32, i32) {
    %c0_i32 = arith.constant 0 : i32
    %c0_i32_0 = arith.constant 0 : i32
    %c0_i32_1 = arith.constant 0 : i32
    return %c0_i32, %c0_i32_0 : i32, i32
  }
  func.func @transform_7(%arg0: i32, %arg1: i32) -> (i32, i32) {
    %c0_i32 = arith.constant 0 : i32
    %c0_i32_0 = arith.constant 0 : i32
    %c0_i32_1 = arith.constant 0 : i32
    return %c0_i32, %c0_i32_0 : i32, i32
  }
}

</mosaic_0001>

<llo_original>
// kernel: tile.17
$region0: #{tile.17}
  #allocation0 [shape = 's32[1]{0}', space=sflag, size = 0x4, scoped, tag = 'scoped memory for tile.17']
  %s0 = inlined_call_operand.vmem [shape: f32[8], index: 0, kind: input, shape index: {}]
  %s1 = inlined_call_operand.vmem [shape: f32[2,8], index: 1, kind: output, shape index: {}]
  // Predicated region
  $region2: #{tile.17} parent=0 // pred_check
    _
  $region3: #{tile.17} parent=0 // pred_check_branch
    %3 = sbr.rel (0) target = $region5
  $region4: #{tile.17} parent=0 // pred_region
    _
  $region5: #{tile.17} parent=0 // pred_fallthru
    _
  %v4 = vld [vmem:[%s0] ss:$0 sm:$0xff]
  %5 = vst [vmem:[%s1] sm:$0x3] %v4

// kernel: tile.19
$region0: #{tile.19}
  %s0 = inlined_call_operand.vmem [shape: f32[2,8], index: 0, kind: input, shape index: {}]
  %s1 = inlined_call_operand.vmem [shape: f32[1,16], index: 1, kind: output, shape index: {}]
  $region1: #{tile.19} parent=0
    #allocation0 [shape = 'u8[4096]{0}', space=vmem, size = 0x1000, scoped, tag = 'scoped mem for output reshape']
    #allocation1 [shape = 'u8[4096]{0}', space=vmem, size = 0x1000, scoped, tag = 'scoped mem for input reshape']
    %s3 = sshll.u32 1, 2
    %s4 = ssub.s32 %s3, 1
    %v5 = vld [vmem:[%s0] sm:%s4]
    %6 = vst [vmem:[#allocation1] sm:%s4] %v5
    %v7 = vld [vmem:[#allocation1] sm:$0x1]
    %vm8 = vcmask 64512
    %9 = vst.msk [vmem:[#allocation0] sm:$0x1] %vm8, %v7
    %s10 = scalar_lea.vmem [#allocation1], 1
    %v11 = vld [vmem:[%s10] sm:$0x1]
    %12 = vrot.lane.b32.xlu0 %v11, 8
    %v13 = vpop.permute.xlu0 %12
    %vm14 = vcmask 130112
    %15 = vst.msk [vmem:[#allocation0] sm:$0x1] %vm14, %v13
    %s17 = sshll.u32 1, 1
    %s18 = ssub.s32 %s17, 1
    %v20 = vld [vmem:[#allocation0] sm:%s18]
    %s21 = sshll.u32 1, 1
    %s22 = ssub.s32 %s21, 1
    %23 = vst [vmem:[%s1] sm:%s22] %v20

// kernel: down_scale.2
$region0: #{down_scale.2}
  #allocation0 [shape = 'u32[]', space=smem, size = 0x4, offset = 0x4, fixed_abs, tag = 'smem constant byte address 0x4 - core index']
  #allocation1 [shape = 'u32[144,128]{1,0:T(1,128)}', space=vmem, size = 0x12000, scoped, tag = 'internal scratch']
  %s0 = inlined_call_operand.vmem [shape: f32[1,2,8,256], index: 0, kind: input, shape index: {}, may-alias: {0,1}]
  %s1 = inlined_call_operand.vmem [shape: f32[1,2,8,256], index: 1, kind: input, shape index: {}, may-alias: {0,1}]
  %s2 = inlined_call_operand.vmem [shape: f32[3,16,8], index: 2, kind: input, shape index: {}]
  %s3 = inlined_call_operand.vmem [shape: f32[16,128], index: 3, kind: output, shape index: {0}]
  %s4 = inlined_call_operand.vmem [shape: f32[16,128], index: 4, kind: output, shape index: {1}]
  %5 = xla_tuple %s3, %s4
  %s6 = sld [smem:[#allocation0]]
  $region118: #{down_scale.2} parent=0
    _
  %s8 = ssub.s32 1, %s6
  %s9 = scalar_select 0, %s8, %s6
  $region1: #{down_scale.2} parent=0
    #allocation2 [shape = 'u8[8192]{0}', space=vmem, size = 0x2000, scoped, tag = 'input window, operand 0, single buffered']
    #allocation3 [shape = 'u8[8192]{0}', space=vmem, size = 0x2000, scoped, tag = 'input window, operand 1, single buffered']
    // Predicated region
    $region2: #{down_scale.2} parent=1 // pred_check
      _
    $region3: #{down_scale.2} parent=1 // pred_check_branch
      %11 = sbr.rel (0) target = $region5
    $region4: #{down_scale.2} parent=1 // pred_region
      // Predicated region
      $region6: #{down_scale.2} parent=4 // pred_check
        _
      $region7: #{down_scale.2} parent=4 // pred_check_branch
        %13 = sbr.rel (0) target = $region9
      $region8: #{down_scale.2} parent=4 // pred_region
        // Predicated region
        $region10: #{down_scale.2} parent=8 // pred_check
          _
        $region11: #{down_scale.2} parent=8 // pred_check_branch
          %15 = sbr.rel (0) target = $region13
        $region12: #{down_scale.2} parent=8 // pred_region
          // Predicated region
          $region25: #{down_scale.2} parent=12 // pred_check
            _
          $region26: #{down_scale.2} parent=12 // pred_check_branch
            %33 = sbr.rel (0) target = $region28
          $region27: #{down_scale.2} parent=12 // pred_region
            loop: start=0, step=1, limit=1
            $region29: #{down_scale.2} parent=27 // loop_pre_header
              _
            $region30: #{down_scale.2} parent=27 // loop_header
              %s35 = sphi 0, %s39
              %p36 = scmp.ge.s32.totalorder %s35, 1
              %s40 = sphi %s0, %s0
              %s41 = sphi [#allocation2], [#allocation2]
            $region31: #{down_scale.2} parent=27 // loop_header_branch
              %38 = sbr.rel (%p36) target = $region35
            $region32: #{down_scale.2} parent=27 // loop_body
              %v42 = vld [vmem:[%s40] sm:$0xff]
              %43 = vst [vmem:[%s41] sm:$0xff] %v42
              %v44 = vld [vmem:[%s40 + $0x10] sm:$0xff]
              %45 = vst [vmem:[%s41 + $0x8] sm:$0xff] %v44
            $region33: #{down_scale.2} parent=27 // loop_footer
              %s39 = sadd.s32 1, %s35
            $region34: #{down_scale.2} parent=27 // loop_footer_branch
              %34 = sbr.rel target = $region30
            $region35: #{down_scale.2} parent=27 // loop_exit
              _
          $region28: #{down_scale.2} parent=12 // pred_fallthru
            _
          // Predicated region
          $region36: #{down_scale.2} parent=12 // pred_check
            _
          $region37: #{down_scale.2} parent=12 // pred_check_branch
            %47 = sbr.rel target = $region39
          $region38: #{down_scale.2} parent=12 // pred_region
            _
          $region39: #{down_scale.2} parent=12 // pred_fallthru
            _
        $region13: #{down_scale.2} parent=8 // pred_fallthru
          _
        // Predicated region
        $region14: #{down_scale.2} parent=8 // pred_check
          _
        $region15: #{down_scale.2} parent=8 // pred_check_branch
          %17 = sbr.rel target = $region17
        $region16: #{down_scale.2} parent=8 // pred_region
          %s19 = ssub.s32 256, 1
          loop: start=0, step=1, limit=1
          $region18: #{down_scale.2} parent=16 // loop_pre_header
            _
          $region19: #{down_scale.2} parent=16 // loop_header
            %s21 = sphi 0, %s25
            %p22 = scmp.ge.s32.totalorder %s21, 1
            %s26 = sphi %s0, %s0
            %s27 = sphi [#allocation2], [#allocation2]
          $region20: #{down_scale.2} parent=16 // loop_header_branch
            %24 = sbr.rel (%p22) target = $region24
          $region21: #{down_scale.2} parent=16 // loop_body
            %v28 = vld [vmem:[%s26] sm:%s19]
            %29 = vst [vmem:[%s27] sm:%s19] %v28
            %v30 = vld [vmem:[%s26 + $0x10] sm:%s19]
            %31 = vst [vmem:[%s27 + $0x8] sm:%s19] %v30
          $region22: #{down_scale.2} parent=16 // loop_footer
            %s25 = sadd.s32 1, %s21
          $region23: #{down_scale.2} parent=16 // loop_footer_branch
            %20 = sbr.rel target = $region19
          $region24: #{down_scale.2} parent=16 // loop_exit
            _
        $region17: #{down_scale.2} parent=8 // pred_fallthru
          _
      $region9: #{down_scale.2} parent=4 // pred_fallthru
        _
      %48 = vnop
    $region5: #{down_scale.2} parent=1 // pred_fallthru
      _
    // Predicated region
    $region40: #{down_scale.2} parent=1 // pred_check
      _
    $region41: #{down_scale.2} parent=1 // pred_check_branch
      %50 = sbr.rel (0) target = $region43
    $region42: #{down_scale.2} parent=1 // pred_region
      %s51 = sadd.s32 0, 1
      %s52 = smul.addr %s51, 8
      %s53 = scalar_lea.vmem %s1, %s52
      // Predicated region
      $region44: #{down_scale.2} parent=42 // pred_check
        _
      $region45: #{down_scale.2} parent=42 // pred_check_branch
        %55 = sbr.rel (0) target = $region47
      $region46: #{down_scale.2} parent=42 // pred_region
        // Predicated region
        $region48: #{down_scale.2} parent=46 // pred_check
          _
        $region49: #{down_scale.2} parent=46 // pred_check_branch
          %57 = sbr.rel (0) target = $region51
        $region50: #{down_scale.2} parent=46 // pred_region
          // Predicated region
          $region63: #{down_scale.2} parent=50 // pred_check
            _
          $region64: #{down_scale.2} parent=50 // pred_check_branch
            %75 = sbr.rel (0) target = $region66
          $region65: #{down_scale.2} parent=50 // pred_region
            loop: start=0, step=1, limit=1
            $region67: #{down_scale.2} parent=65 // loop_pre_header
              _
            $region68: #{down_scale.2} parent=65 // loop_header
              %s77 = sphi 0, %s81
              %p78 = scmp.ge.s32.totalorder %s77, 1
              %s82 = sphi %s53, %s53
              %s83 = sphi [#allocation3], [#allocation3]
            $region69: #{down_scale.2} parent=65 // loop_header_branch
              %80 = sbr.rel (%p78) target = $region73
            $region70: #{down_scale.2} parent=65 // loop_body
              %v84 = vld [vmem:[%s82] sm:$0xff]
              %85 = vst [vmem:[%s83] sm:$0xff] %v84
              %v86 = vld [vmem:[%s82 + $0x10] sm:$0xff]
              %87 = vst [vmem:[%s83 + $0x8] sm:$0xff] %v86
            $region71: #{down_scale.2} parent=65 // loop_footer
              %s81 = sadd.s32 1, %s77
            $region72: #{down_scale.2} parent=65 // loop_footer_branch
              %76 = sbr.rel target = $region68
            $region73: #{down_scale.2} parent=65 // loop_exit
              _
          $region66: #{down_scale.2} parent=50 // pred_fallthru
            _
          // Predicated region
          $region74: #{down_scale.2} parent=50 // pred_check
            _
          $region75: #{down_scale.2} parent=50 // pred_check_branch
            %89 = sbr.rel target = $region77
          $region76: #{down_scale.2} parent=50 // pred_region
            _
          $region77: #{down_scale.2} parent=50 // pred_fallthru
            _
        $region51: #{down_scale.2} parent=46 // pred_fallthru
          _
        // Predicated region
        $region52: #{down_scale.2} parent=46 // pred_check
          _
        $region53: #{down_scale.2} parent=46 // pred_check_branch
          %59 = sbr.rel target = $region55
        $region54: #{down_scale.2} parent=46 // pred_region
          %s61 = ssub.s32 256, 1
          loop: start=0, step=1, limit=1
          $region56: #{down_scale.2} parent=54 // loop_pre_header
            _
          $region57: #{down_scale.2} parent=54 // loop_header
            %s63 = sphi 0, %s67
            %p64 = scmp.ge.s32.totalorder %s63, 1
            %s68 = sphi %s53, %s53
            %s69 = sphi [#allocation3], [#allocation3]
          $region58: #{down_scale.2} parent=54 // loop_header_branch
            %66 = sbr.rel (%p64) target = $region62
          $region59: #{down_scale.2} parent=54 // loop_body
            %v70 = vld [vmem:[%s68] sm:%s61]
            %71 = vst [vmem:[%s69] sm:%s61] %v70
            %v72 = vld [vmem:[%s68 + $0x10] sm:%s61]
            %73 = vst [vmem:[%s69 + $0x8] sm:%s61] %v72
          $region60: #{down_scale.2} parent=54 // loop_footer
            %s67 = sadd.s32 1, %s63
          $region61: #{down_scale.2} parent=54 // loop_footer_branch
            %62 = sbr.rel target = $region57
          $region62: #{down_scale.2} parent=54 // loop_exit
            _
        $region55: #{down_scale.2} parent=46 // pred_fallthru
          _
      $region47: #{down_scale.2} parent=42 // pred_fallthru
        _
      %90 = vnop
    $region43: #{down_scale.2} parent=1 // pred_fallthru
      _
    // Predicated region
    $region78: #{down_scale.2} parent=1 // pred_check
      _
    $region79: #{down_scale.2} parent=1 // pred_check_branch
      %92 = sbr.rel (0) target = $region81
    $region80: #{down_scale.2} parent=1 // pred_region
      _
    $region81: #{down_scale.2} parent=1 // pred_fallthru
      _
    // Predicated region
    $region82: #{down_scale.2} parent=1 // pred_check
      _
    $region83: #{down_scale.2} parent=1 // pred_check_branch
      %94 = sbr.rel (0) target = $region85
    $region84: #{down_scale.2} parent=1 // pred_region
      _
    $region85: #{down_scale.2} parent=1 // pred_fallthru
      _
    // Predicated region
    $region86: #{down_scale.2} parent=1 // pred_check
      _
    $region87: #{down_scale.2} parent=1 // pred_check_branch
      %96 = sbr.rel (0) target = $region89
    $region88: #{down_scale.2} parent=1 // pred_region
      _
    $region89: #{down_scale.2} parent=1 // pred_fallthru
      _
    %s97 = sadd.s32 0, 1
    %v98 = vld [vmem:[#allocation2] sm:$0xff]
    %v99 = vld [vmem:[#allocation2 + $0x8] sm:$0xff]
    %v100 = vld [vmem:[#allocation3] sm:$0xff]
    %v101 = vld [vmem:[#allocation3 + $0x8] sm:$0xff]
    %v102 = vmax.f32 %v98, %v99
    %v103 = vmax.f32 %v100, %v101
    %v104 = vld [vmem:[%s2] sm:$0xff]
    %v105 = vld [vmem:[%s2 + $0x8] sm:$0xff]
    %s106 = scalar_lea.vmem %s2, 16
    %v107 = vld [vmem:[%s106] sm:$0xff]
    %v108 = vld [vmem:[%s106 + $0x8] sm:$0xff]
    %111 = vrot.lane.b32.xlu0 %v102, 127
    %v112 = vpop.permute.xlu0 %111
    %113 = vrot.lane.b32.xlu0 %v103, 127
    %v114 = vpop.permute.xlu0 %113
    %vm115 = vcmask 1039360
    %v116 = vsel %vm115, %v112, %v114
    %vm118 = vcmask 64512
    %v120 = vsel %vm118, %v107, 0
    %v123 = vsel %vm118, %v108, 0
    %125 = vmatprep.subr.mxu0 0.0
    %126 = vmatpush1.msra.mxu0 0.0
    %127 = vmatprep.subr.mxu0 0.0
    %128 = vmatpush1.msra.mxu0 0.0
    %129 = vmatprep.subr.mxu0 0.0
    %130 = vmatpush1.msra.mxu0 0.0
    %131 = vmatprep.subr.mxu0 0.0
    %132 = vmatpush1.msra.mxu0 0.0
    %133 = vmatprep.subr.mxu0 0.0
    %134 = vmatpush1.msra.mxu0 0.0
    %135 = vmatprep.subr.mxu0 0.0
    %136 = vmatpush1.msra.mxu0 0.0
    %137 = vmatprep.subr.mxu0 0.0
    %138 = vmatpush1.msra.mxu0 0.0
    %139 = vmatprep.subr.mxu0 0.0
    %140 = vmatpush1.msra.mxu0 0.0
    %141 = vmatprep.subr.mxu0 0.0
    %142 = vmatpush1.msra.mxu0 0.0
    %143 = vmatprep.subr.mxu0 0.0
    %144 = vmatpush1.msra.mxu0 0.0
    %145 = vmatprep.subr.mxu0 0.0
    %146 = vmatpush1.msra.mxu0 0.0
    %147 = vmatprep.subr.mxu0 0.0
    %148 = vmatpush1.msra.mxu0 0.0
    %149 = vmatprep.subr.mxu0 0.0
    %150 = vmatpush1.msra.mxu0 0.0
    %151 = vmatprep.subr.mxu0 0.0
    %152 = vmatpush1.msra.mxu0 0.0
    %153 = vmatprep.subr.mxu0 0.0
    %154 = vmatpush1.msra.mxu0 0.0
    %155 = vmatprep.subr.mxu0 0.0
    %156 = vmatpush1.msra.mxu0 %v116
    %157 = vmatprep.subr.mxu0 0.0
    %158 = vmatpush2.msra.mxu0 0.0
    %159 = vmatprep.subr.mxu0 0.0
    %160 = vmatpush2.msra.mxu0 0.0
    %161 = vmatprep.subr.mxu0 0.0
    %162 = vmatpush2.msra.mxu0 0.0
    %163 = vmatprep.subr.mxu0 0.0
    %164 = vmatpush2.msra.mxu0 0.0
    %165 = vmatprep.subr.mxu0 0.0
    %166 = vmatpush2.msra.mxu0 0.0
    %167 = vmatprep.subr.mxu0 0.0
    %168 = vmatpush2.msra.mxu0 0.0
    %169 = vmatprep.subr.mxu0 0.0
    %170 = vmatpush2.msra.mxu0 0.0
    %171 = vmatprep.subr.mxu0 0.0
    %172 = vmatpush2.msra.mxu0 0.0
    %173 = vmatprep.subr.mxu0 0.0
    %174 = vmatpush2.msra.mxu0 0.0
    %175 = vmatprep.subr.mxu0 0.0
    %176 = vmatpush2.msra.mxu0 0.0
    %177 = vmatprep.subr.mxu0 0.0
    %178 = vmatpush2.msra.mxu0 0.0
    %179 = vmatprep.subr.mxu0 0.0
    %180 = vmatpush2.msra.mxu0 0.0
    %181 = vmatprep.subr.mxu0 0.0
    %182 = vmatpush2.msra.mxu0 0.0
    %183 = vmatprep.subr.mxu0 0.0
    %184 = vmatpush2.msra.mxu0 0.0
    %185 = vmatprep.subr.mxu0 0.0
    %186 = vmatpush2.msra.mxu0 0.0
    %187 = vmatprep.subr.mxu0 0.0
    %188 = vmatpush2.msra.mxu0 0.0
    %189 = vmatprep.mubr.f32.mxu0 0.0
    %190 = vmatmul.mubr.f32.gmra.mxu0 %v120
    %v191 = vpop.f32.mrf.mxu0
    %v192 = vadd.f32 0.0, %v191
    %v193 = vpop.f32.mrf.mxu0
    %194 = vmatprep.mubr.f32.mxu0 0.0
    %195 = vmatmul.mubr.f32.gmra.mxu0 %v123
    %v196 = vpop.f32.mrf.mxu0
    %v197 = vadd.f32 0.0, %v196
    %v198 = vpop.f32.mrf.mxu0
    %199 = vdwg.mxu0
    %v201 = vsel %vm118, %v104, 0
    %v204 = vsel %vm118, %v105, 0
    %206 = vmatprep.subr.mxu0 0.0
    %207 = vmatpush1.msra.mxu0 0.0
    %208 = vmatprep.subr.mxu0 0.0
    %209 = vmatpush1.msra.mxu0 0.0
    %210 = vmatprep.subr.mxu0 0.0
    %211 = vmatpush1.msra.mxu0 0.0
    %212 = vmatprep.subr.mxu0 0.0
    %213 = vmatpush1.msra.mxu0 0.0
    %214 = vmatprep.subr.mxu0 0.0
    %215 = vmatpush1.msra.mxu0 0.0
    %216 = vmatprep.subr.mxu0 0.0
    %217 = vmatpush1.msra.mxu0 0.0
    %218 = vmatprep.subr.mxu0 0.0
    %219 = vmatpush1.msra.mxu0 0.0
    %220 = vmatprep.subr.mxu0 0.0
    %221 = vmatpush1.msra.mxu0 0.0
    %222 = vmatprep.subr.mxu0 0.0
    %223 = vmatpush1.msra.mxu0 0.0
    %224 = vmatprep.subr.mxu0 0.0
    %225 = vmatpush1.msra.mxu0 0.0
    %226 = vmatprep.subr.mxu0 0.0
    %227 = vmatpush1.msra.mxu0 0.0
    %228 = vmatprep.subr.mxu0 0.0
    %229 = vmatpush1.msra.mxu0 0.0
    %230 = vmatprep.subr.mxu0 0.0
    %231 = vmatpush1.msra.mxu0 0.0
    %232 = vmatprep.subr.mxu0 0.0
    %233 = vmatpush1.msra.mxu0 0.0
    %234 = vmatprep.subr.mxu0 0.0
    %235 = vmatpush1.msra.mxu0 0.0
    %236 = vmatprep.subr.mxu0 0.0
    %237 = vmatpush1.msra.mxu0 %v102
    %238 = vmatprep.subr.mxu0 0.0
    %239 = vmatpush2.msra.mxu0 0.0
    %240 = vmatprep.subr.mxu0 0.0
    %241 = vmatpush2.msra.mxu0 0.0
    %242 = vmatprep.subr.mxu0 0.0
    %243 = vmatpush2.msra.mxu0 0.0
    %244 = vmatprep.subr.mxu0 0.0
    %245 = vmatpush2.msra.mxu0 0.0
    %246 = vmatprep.subr.mxu0 0.0
    %247 = vmatpush2.msra.mxu0 0.0
    %248 = vmatprep.subr.mxu0 0.0
    %249 = vmatpush2.msra.mxu0 0.0
    %250 = vmatprep.subr.mxu0 0.0
    %251 = vmatpush2.msra.mxu0 0.0
    %252 = vmatprep.subr.mxu0 0.0
    %253 = vmatpush2.msra.mxu0 0.0
    %254 = vmatprep.subr.mxu0 0.0
    %255 = vmatpush2.msra.mxu0 0.0
    %256 = vmatprep.subr.mxu0 0.0
    %257 = vmatpush2.msra.mxu0 0.0
    %258 = vmatprep.subr.mxu0 0.0
    %259 = vmatpush2.msra.mxu0 0.0
    %260 = vmatprep.subr.mxu0 0.0
    %261 = vmatpush2.msra.mxu0 0.0
    %262 = vmatprep.subr.mxu0 0.0
    %263 = vmatpush2.msra.mxu0 0.0
    %264 = vmatprep.subr.mxu0 0.0
    %265 = vmatpush2.msra.mxu0 0.0
    %266 = vmatprep.subr.mxu0 0.0
    %267 = vmatpush2.msra.mxu0 0.0
    %268 = vmatprep.subr.mxu0 0.0
    %269 = vmatpush2.msra.mxu0 0.0
    %270 = vmatprep.mubr.f32.mxu0 0.0
    %271 = vmatmul.mubr.f32.gmra.mxu0 %v201
    %v272 = vpop.f32.mrf.mxu0
    %v273 = vadd.f32 %v192, %v272
    %v274 = vpop.f32.mrf.mxu0
    %275 = vmatprep.mubr.f32.mxu0 0.0
    %276 = vmatmul.mubr.f32.gmra.mxu0 %v204
    %v277 = vpop.f32.mrf.mxu0
    %v278 = vadd.f32 %v197, %v277
    %v279 = vpop.f32.mrf.mxu0
    %280 = vdwg.mxu0
    %s281 = scalar_lea.vmem %s2, 32
    %v282 = vld [vmem:[%s281] sm:$0xff]
    %v283 = vld [vmem:[%s281 + $0x8] sm:$0xff]
    %284 = vrot.lane.b32.xlu0 %v102, 126
    %v285 = vpop.permute.xlu0 %284
    %286 = vrot.lane.b32.xlu0 %v103, 126
    %v287 = vpop.permute.xlu0 %286
    %vm288 = vcmask 1031168
    %v289 = vsel %vm288, %v285, %v287
    %v292 = vsel %vm118, %v282, 0
    %v295 = vsel %vm118, %v283, 0
    %297 = vmatprep.subr.mxu0 0.0
    %298 = vmatpush1.msra.mxu0 0.0
    %299 = vmatprep.subr.mxu0 0.0
    %300 = vmatpush1.msra.mxu0 0.0
    %301 = vmatprep.subr.mxu0 0.0
    %302 = vmatpush1.msra.mxu0 0.0
    %303 = vmatprep.subr.mxu0 0.0
    %304 = vmatpush1.msra.mxu0 0.0
    %305 = vmatprep.subr.mxu0 0.0
    %306 = vmatpush1.msra.mxu0 0.0
    %307 = vmatprep.subr.mxu0 0.0
    %308 = vmatpush1.msra.mxu0 0.0
    %309 = vmatprep.subr.mxu0 0.0
    %310 = vmatpush1.msra.mxu0 0.0
    %311 = vmatprep.subr.mxu0 0.0
    %312 = vmatpush1.msra.mxu0 0.0
    %313 = vmatprep.subr.mxu0 0.0
    %314 = vmatpush1.msra.mxu0 0.0
    %315 = vmatprep.subr.mxu0 0.0
    %316 = vmatpush1.msra.mxu0 0.0
    %317 = vmatprep.subr.mxu0 0.0
    %318 = vmatpush1.msra.mxu0 0.0
    %319 = vmatprep.subr.mxu0 0.0
    %320 = vmatpush1.msra.mxu0 0.0
    %321 = vmatprep.subr.mxu0 0.0
    %322 = vmatpush1.msra.mxu0 0.0
    %323 = vmatprep.subr.mxu0 0.0
    %324 = vmatpush1.msra.mxu0 0.0
    %325 = vmatprep.subr.mxu0 0.0
    %326 = vmatpush1.msra.mxu0 0.0
    %327 = vmatprep.subr.mxu0 0.0
    %328 = vmatpush1.msra.mxu0 %v289
    %329 = vmatprep.subr.mxu0 0.0
    %330 = vmatpush2.msra.mxu0 0.0
    %331 = vmatprep.subr.mxu0 0.0
    %332 = vmatpush2.msra.mxu0 0.0
    %333 = vmatprep.subr.mxu0 0.0
    %334 = vmatpush2.msra.mxu0 0.0
    %335 = vmatprep.subr.mxu0 0.0
    %336 = vmatpush2.msra.mxu0 0.0
    %337 = vmatprep.subr.mxu0 0.0
    %338 = vmatpush2.msra.mxu0 0.0
    %339 = vmatprep.subr.mxu0 0.0
    %340 = vmatpush2.msra.mxu0 0.0
    %341 = vmatprep.subr.mxu0 0.0
    %342 = vmatpush2.msra.mxu0 0.0
    %343 = vmatprep.subr.mxu0 0.0
    %344 = vmatpush2.msra.mxu0 0.0
    %345 = vmatprep.subr.mxu0 0.0
    %346 = vmatpush2.msra.mxu0 0.0
    %347 = vmatprep.subr.mxu0 0.0
    %348 = vmatpush2.msra.mxu0 0.0
    %349 = vmatprep.subr.mxu0 0.0
    %350 = vmatpush2.msra.mxu0 0.0
    %351 = vmatprep.subr.mxu0 0.0
    %352 = vmatpush2.msra.mxu0 0.0
    %353 = vmatprep.subr.mxu0 0.0
    %354 = vmatpush2.msra.mxu0 0.0
    %355 = vmatprep.subr.mxu0 0.0
    %356 = vmatpush2.msra.mxu0 0.0
    %357 = vmatprep.subr.mxu0 0.0
    %358 = vmatpush2.msra.mxu0 0.0
    %359 = vmatprep.subr.mxu0 0.0
    %360 = vmatpush2.msra.mxu0 0.0
    %361 = vmatprep.mubr.f32.mxu0 0.0
    %362 = vmatmul.mubr.f32.gmra.mxu0 %v292
    %v363 = vpop.f32.mrf.mxu0
    %v364 = vadd.f32 0.0, %v363
    %v365 = vpop.f32.mrf.mxu0
    %366 = vmatprep.mubr.f32.mxu0 0.0
    %367 = vmatmul.mubr.f32.gmra.mxu0 %v295
    %v368 = vpop.f32.mrf.mxu0
    %v369 = vadd.f32 0.0, %v368
    %v370 = vpop.f32.mrf.mxu0
    %371 = vdwg.mxu0
    %v372 = vadd.f32 %v273, %v364
    %v373 = vadd.f32 %v278, %v369
    %p374 = scmp.eq.s32.totalorder 0, 0
    %p375 = scmp.eq.s32.totalorder 0, 0
    %p376 = pnand %p374, %p375
    %p377 = pneg %p376
    // Predicated region
    $region90: #{down_scale.2} parent=1 // pred_check
      _
    $region91: #{down_scale.2} parent=1 // pred_check_branch
      %379 = sbr.rel (%p376) target = $region93
    $region92: #{down_scale.2} parent=1 // pred_region
      %380 = vst [vmem:[%s3] sm:$0xff] 0.0
      %381 = vst [vmem:[%s3 + $0x8] sm:$0xff] 0.0
      %382 = vst [vmem:[%s4] sm:$0xff] 0.0
      %383 = vst [vmem:[%s4 + $0x8] sm:$0xff] 0.0
    $region93: #{down_scale.2} parent=1 // pred_fallthru
      _
    %p384 = scmp.lt.s32.totalorder 0, 0
    // Predicated region
    $region94: #{down_scale.2} parent=1 // pred_check
      %p385 = pneg %p384
    $region95: #{down_scale.2} parent=1 // pred_check_branch
      %387 = sbr.rel (%p385) target = $region97
    $region96: #{down_scale.2} parent=1 // pred_region
      %v388 = vld [vmem:[%s3] sm:$0xff]
      %v389 = vld [vmem:[%s3 + $0x8] sm:$0xff]
      %v390 = vadd.f32 %v388, %v372
      %v391 = vadd.f32 %v389, %v373
      %392 = vst [vmem:[%s3] sm:$0xff] %v390
      %393 = vst [vmem:[%s3 + $0x8] sm:$0xff] %v391
      %v394 = vld [vmem:[%s4] sm:$0xff]
      %v395 = vld [vmem:[%s4 + $0x8] sm:$0xff]
      %v396 = vmul.f32 %v372, %v372
      %v397 = vmul.f32 %v373, %v373
      %v398 = vadd.f32 %v394, %v396
      %v399 = vadd.f32 %v395, %v397
      %400 = vst [vmem:[%s4] sm:$0xff] %v398
      %401 = vst [vmem:[%s4 + $0x8] sm:$0xff] %v399
    $region97: #{down_scale.2} parent=1 // pred_fallthru
      _
    // Predicated region
    $region98: #{down_scale.2} parent=1 // pred_check
      %p402 = pneg %p375
    $region99: #{down_scale.2} parent=1 // pred_check_branch
      %404 = sbr.rel (%p402) target = $region101
    $region100: #{down_scale.2} parent=1 // pred_region
      %v405 = vlaneseq
      %v406 = vand.u32 %v405, 127
      %vm407 = vcmp.lt.s32.totalorder %v406, 6
      %v408 = vsel %vm407, 1, 0
      %vm409 = vcmp.eq.s32.totalorder %v408, 1
      %v410 = vsel %vm409, %v372, 0.0
      %v411 = vsel %vm409, %v373, 0.0
      %v412 = vld [vmem:[%s3] sm:$0xff]
      %v413 = vld [vmem:[%s3 + $0x8] sm:$0xff]
      %v414 = vadd.f32 %v412, %v410
      %v415 = vadd.f32 %v413, %v411
      %416 = vst [vmem:[%s3] sm:$0xff] %v414
      %417 = vst [vmem:[%s3 + $0x8] sm:$0xff] %v415
      %v418 = vld [vmem:[%s4] sm:$0xff]
      %v419 = vld [vmem:[%s4 + $0x8] sm:$0xff]
      %v420 = vmul.f32 %v410, %v410
      %v421 = vmul.f32 %v411, %v411
      %v422 = vadd.f32 %v418, %v420
      %v423 = vadd.f32 %v419, %v421
      %424 = vst [vmem:[%s4] sm:$0xff] %v422
      %425 = vst [vmem:[%s4 + $0x8] sm:$0xff] %v423
    $region101: #{down_scale.2} parent=1 // pred_fallthru
      _
    // Predicated region
    $region102: #{down_scale.2} parent=1 // pred_check
      _
    $region103: #{down_scale.2} parent=1 // pred_check_branch
      %427 = sbr.rel (0) target = $region105
    $region104: #{down_scale.2} parent=1 // pred_region
      _
    $region105: #{down_scale.2} parent=1 // pred_fallthru
      _
    // Predicated region
    $region106: #{down_scale.2} parent=1 // pred_check
      _
    $region107: #{down_scale.2} parent=1 // pred_check_branch
      %429 = sbr.rel (0) target = $region109
    $region108: #{down_scale.2} parent=1 // pred_region
      _
    $region109: #{down_scale.2} parent=1 // pred_fallthru
      _
    // Predicated region
    $region110: #{down_scale.2} parent=1 // pred_check
      _
    $region111: #{down_scale.2} parent=1 // pred_check_branch
      %431 = sbr.rel (0) target = $region113
    $region112: #{down_scale.2} parent=1 // pred_region
      _
    $region113: #{down_scale.2} parent=1 // pred_fallthru
      _
    // Predicated region
    $region114: #{down_scale.2} parent=1 // pred_check
      _
    $region115: #{down_scale.2} parent=1 // pred_check_branch
      %433 = sbr.rel (0) target = $region117
    $region116: #{down_scale.2} parent=1 // pred_region
      _
    $region117: #{down_scale.2} parent=1 // pred_fallthru
      _

// kernel: down_scale.3
$region0: #{down_scale.3}
  #allocation0 [shape = 'u32[]', space=smem, size = 0x4, offset = 0x4, fixed_abs, tag = 'smem constant byte address 0x4 - core index']
  #allocation1 [shape = 'u32[144,128]{1,0:T(1,128)}', space=vmem, size = 0x12000, scoped, tag = 'internal scratch']
  %s0 = inlined_call_operand.vmem [shape: f32[1,2,8,256], index: 0, kind: input, shape index: {}, may-alias: {0,1}]
  %s1 = inlined_call_operand.vmem [shape: f32[1,2,8,256], index: 1, kind: input, shape index: {}, may-alias: {0,1}]
  %s2 = inlined_call_operand.vmem [shape: f32[3,16,8], index: 2, kind: input, shape index: {}]
  %s3 = inlined_call_operand.vmem [shape: f32[2,16,1], index: 3, kind: input, shape index: {}]
  %s4 = inlined_call_operand.vmem [shape: f32[3,16,16], index: 4, kind: input, shape index: {}]
  %s5 = inlined_call_operand.vmem [shape: f32[1,16,128], index: 5, kind: output, shape index: {0}]
  %s6 = inlined_call_operand.vmem [shape: f32[16,128], index: 6, kind: output, shape index: {1}]
  %s7 = inlined_call_operand.vmem [shape: f32[16,128], index: 7, kind: output, shape index: {2}]
  %8 = xla_tuple %s5, %s6, %s7
  %s9 = sld [smem:[#allocation0]]
  $region134: #{down_scale.3} parent=0
    _
  %s11 = ssub.s32 1, %s9
  %s12 = scalar_select 0, %s11, %s9
  $region1: #{down_scale.3} parent=0
    #allocation2 [shape = 'u8[8192]{0}', space=vmem, size = 0x2000, scoped, tag = 'input window, operand 0, single buffered']
    #allocation3 [shape = 'u8[8192]{0}', space=vmem, size = 0x2000, scoped, tag = 'input window, operand 1, single buffered']
    // Predicated region
    $region2: #{down_scale.3} parent=1 // pred_check
      _
    $region3: #{down_scale.3} parent=1 // pred_check_branch
      %14 = sbr.rel (0) target = $region5
    $region4: #{down_scale.3} parent=1 // pred_region
      // Predicated region
      $region6: #{down_scale.3} parent=4 // pred_check
        _
      $region7: #{down_scale.3} parent=4 // pred_check_branch
        %16 = sbr.rel (0) target = $region9
      $region8: #{down_scale.3} parent=4 // pred_region
        // Predicated region
        $region10: #{down_scale.3} parent=8 // pred_check
          _
        $region11: #{down_scale.3} parent=8 // pred_check_branch
          %18 = sbr.rel (0) target = $region13
        $region12: #{down_scale.3} parent=8 // pred_region
          // Predicated region
          $region25: #{down_scale.3} parent=12 // pred_check
            _
          $region26: #{down_scale.3} parent=12 // pred_check_branch
            %36 = sbr.rel (0) target = $region28
          $region27: #{down_scale.3} parent=12 // pred_region
            loop: start=0, step=1, limit=1
            $region29: #{down_scale.3} parent=27 // loop_pre_header
              _
            $region30: #{down_scale.3} parent=27 // loop_header
              %s38 = sphi 0, %s42
              %p39 = scmp.ge.s32.totalorder %s38, 1
              %s43 = sphi %s0, %s0
              %s44 = sphi [#allocation2], [#allocation2]
            $region31: #{down_scale.3} parent=27 // loop_header_branch
              %41 = sbr.rel (%p39) target = $region35
            $region32: #{down_scale.3} parent=27 // loop_body
              %v45 = vld [vmem:[%s43] sm:$0xff]
              %46 = vst [vmem:[%s44] sm:$0xff] %v45
              %v47 = vld [vmem:[%s43 + $0x10] sm:$0xff]
              %48 = vst [vmem:[%s44 + $0x8] sm:$0xff] %v47
            $region33: #{down_scale.3} parent=27 // loop_footer
              %s42 = sadd.s32 1, %s38
            $region34: #{down_scale.3} parent=27 // loop_footer_branch
              %37 = sbr.rel target = $region30
            $region35: #{down_scale.3} parent=27 // loop_exit
              _
          $region28: #{down_scale.3} parent=12 // pred_fallthru
            _
          // Predicated region
          $region36: #{down_scale.3} parent=12 // pred_check
            _
          $region37: #{down_scale.3} parent=12 // pred_check_branch
            %50 = sbr.rel target = $region39
          $region38: #{down_scale.3} parent=12 // pred_region
            _
          $region39: #{down_scale.3} parent=12 // pred_fallthru
            _
        $region13: #{down_scale.3} parent=8 // pred_fallthru
          _
        // Predicated region
        $region14: #{down_scale.3} parent=8 // pred_check
          _
        $region15: #{down_scale.3} parent=8 // pred_check_branch
          %20 = sbr.rel target = $region17
        $region16: #{down_scale.3} parent=8 // pred_region
          %s22 = ssub.s32 256, 1
          loop: start=0, step=1, limit=1
          $region18: #{down_scale.3} parent=16 // loop_pre_header
            _
          $region19: #{down_scale.3} parent=16 // loop_header
            %s24 = sphi 0, %s28
            %p25 = scmp.ge.s32.totalorder %s24, 1
            %s29 = sphi %s0, %s0
            %s30 = sphi [#allocation2], [#allocation2]
          $region20: #{down_scale.3} parent=16 // loop_header_branch
            %27 = sbr.rel (%p25) target = $region24
          $region21: #{down_scale.3} parent=16 // loop_body
            %v31 = vld [vmem:[%s29] sm:%s22]
            %32 = vst [vmem:[%s30] sm:%s22] %v31
            %v33 = vld [vmem:[%s29 + $0x10] sm:%s22]
            %34 = vst [vmem:[%s30 + $0x8] sm:%s22] %v33
          $region22: #{down_scale.3} parent=16 // loop_footer
            %s28 = sadd.s32 1, %s24
          $region23: #{down_scale.3} parent=16 // loop_footer_branch
            %23 = sbr.rel target = $region19
          $region24: #{down_scale.3} parent=16 // loop_exit
            _
        $region17: #{down_scale.3} parent=8 // pred_fallthru
          _
      $region9: #{down_scale.3} parent=4 // pred_fallthru
        _
      %51 = vnop
    $region5: #{down_scale.3} parent=1 // pred_fallthru
      _
    // Predicated region
    $region40: #{down_scale.3} parent=1 // pred_check
      _
    $region41: #{down_scale.3} parent=1 // pred_check_branch
      %53 = sbr.rel (0) target = $region43
    $region42: #{down_scale.3} parent=1 // pred_region
      %s54 = sadd.s32 0, 1
      %s55 = smul.addr %s54, 8
      %s56 = scalar_lea.vmem %s1, %s55
      // Predicated region
      $region44: #{down_scale.3} parent=42 // pred_check
        _
      $region45: #{down_scale.3} parent=42 // pred_check_branch
        %58 = sbr.rel (0) target = $region47
      $region46: #{down_scale.3} parent=42 // pred_region
        // Predicated region
        $region48: #{down_scale.3} parent=46 // pred_check
          _
        $region49: #{down_scale.3} parent=46 // pred_check_branch
          %60 = sbr.rel (0) target = $region51
        $region50: #{down_scale.3} parent=46 // pred_region
          // Predicated region
          $region63: #{down_scale.3} parent=50 // pred_check
            _
          $region64: #{down_scale.3} parent=50 // pred_check_branch
            %78 = sbr.rel (0) target = $region66
          $region65: #{down_scale.3} parent=50 // pred_region
            loop: start=0, step=1, limit=1
            $region67: #{down_scale.3} parent=65 // loop_pre_header
              _
            $region68: #{down_scale.3} parent=65 // loop_header
              %s80 = sphi 0, %s84
              %p81 = scmp.ge.s32.totalorder %s80, 1
              %s85 = sphi %s56, %s56
              %s86 = sphi [#allocation3], [#allocation3]
            $region69: #{down_scale.3} parent=65 // loop_header_branch
              %83 = sbr.rel (%p81) target = $region73
            $region70: #{down_scale.3} parent=65 // loop_body
              %v87 = vld [vmem:[%s85] sm:$0xff]
              %88 = vst [vmem:[%s86] sm:$0xff] %v87
              %v89 = vld [vmem:[%s85 + $0x10] sm:$0xff]
              %90 = vst [vmem:[%s86 + $0x8] sm:$0xff] %v89
            $region71: #{down_scale.3} parent=65 // loop_footer
              %s84 = sadd.s32 1, %s80
            $region72: #{down_scale.3} parent=65 // loop_footer_branch
              %79 = sbr.rel target = $region68
            $region73: #{down_scale.3} parent=65 // loop_exit
              _
          $region66: #{down_scale.3} parent=50 // pred_fallthru
            _
          // Predicated region
          $region74: #{down_scale.3} parent=50 // pred_check
            _
          $region75: #{down_scale.3} parent=50 // pred_check_branch
            %92 = sbr.rel target = $region77
          $region76: #{down_scale.3} parent=50 // pred_region
            _
          $region77: #{down_scale.3} parent=50 // pred_fallthru
            _
        $region51: #{down_scale.3} parent=46 // pred_fallthru
          _
        // Predicated region
        $region52: #{down_scale.3} parent=46 // pred_check
          _
        $region53: #{down_scale.3} parent=46 // pred_check_branch
          %62 = sbr.rel target = $region55
        $region54: #{down_scale.3} parent=46 // pred_region
          %s64 = ssub.s32 256, 1
          loop: start=0, step=1, limit=1
          $region56: #{down_scale.3} parent=54 // loop_pre_header
            _
          $region57: #{down_scale.3} parent=54 // loop_header
            %s66 = sphi 0, %s70
            %p67 = scmp.ge.s32.totalorder %s66, 1
            %s71 = sphi %s56, %s56
            %s72 = sphi [#allocation3], [#allocation3]
          $region58: #{down_scale.3} parent=54 // loop_header_branch
            %69 = sbr.rel (%p67) target = $region62
          $region59: #{down_scale.3} parent=54 // loop_body
            %v73 = vld [vmem:[%s71] sm:%s64]
            %74 = vst [vmem:[%s72] sm:%s64] %v73
            %v75 = vld [vmem:[%s71 + $0x10] sm:%s64]
            %76 = vst [vmem:[%s72 + $0x8] sm:%s64] %v75
          $region60: #{down_scale.3} parent=54 // loop_footer
            %s70 = sadd.s32 1, %s66
          $region61: #{down_scale.3} parent=54 // loop_footer_branch
            %65 = sbr.rel target = $region57
          $region62: #{down_scale.3} parent=54 // loop_exit
            _
        $region55: #{down_scale.3} parent=46 // pred_fallthru
          _
      $region47: #{down_scale.3} parent=42 // pred_fallthru
        _
      %93 = vnop
    $region43: #{down_scale.3} parent=1 // pred_fallthru
      _
    // Predicated region
    $region78: #{down_scale.3} parent=1 // pred_check
      _
    $region79: #{down_scale.3} parent=1 // pred_check_branch
      %95 = sbr.rel (0) target = $region81
    $region80: #{down_scale.3} parent=1 // pred_region
      _
    $region81: #{down_scale.3} parent=1 // pred_fallthru
      _
    // Predicated region
    $region82: #{down_scale.3} parent=1 // pred_check
      _
    $region83: #{down_scale.3} parent=1 // pred_check_branch
      %97 = sbr.rel (0) target = $region85
    $region84: #{down_scale.3} parent=1 // pred_region
      _
    $region85: #{down_scale.3} parent=1 // pred_fallthru
      _
    // Predicated region
    $region86: #{down_scale.3} parent=1 // pred_check
      _
    $region87: #{down_scale.3} parent=1 // pred_check_branch
      %99 = sbr.rel (0) target = $region89
    $region88: #{down_scale.3} parent=1 // pred_region
      _
    $region89: #{down_scale.3} parent=1 // pred_fallthru
      _
    // Predicated region
    $region90: #{down_scale.3} parent=1 // pred_check
      _
    $region91: #{down_scale.3} parent=1 // pred_check_branch
      %101 = sbr.rel (0) target = $region93
    $region92: #{down_scale.3} parent=1 // pred_region
      _
    $region93: #{down_scale.3} parent=1 // pred_fallthru
      _
    // Predicated region
    $region94: #{down_scale.3} parent=1 // pred_check
      _
    $region95: #{down_scale.3} parent=1 // pred_check_branch
      %103 = sbr.rel (0) target = $region97
    $region96: #{down_scale.3} parent=1 // pred_region
      _
    $region97: #{down_scale.3} parent=1 // pred_fallthru
      _
    %s104 = sadd.s32 0, 1
    %v105 = vld [vmem:[#allocation2] sm:$0xff]
    %v106 = vld [vmem:[#allocation2 + $0x8] sm:$0xff]
    %v107 = vld [vmem:[#allocation3] sm:$0xff]
    %v108 = vld [vmem:[#allocation3 + $0x8] sm:$0xff]
    %v109 = vmax.f32 %v105, %v106
    %v110 = vmax.f32 %v107, %v108
    %v111 = vld [vmem:[%s2] sm:$0xff]
    %v112 = vld [vmem:[%s2 + $0x8] sm:$0xff]
    %s113 = scalar_lea.vmem %s2, 16
    %v114 = vld [vmem:[%s113] sm:$0xff]
    %v115 = vld [vmem:[%s113 + $0x8] sm:$0xff]
    %118 = vrot.lane.b32.xlu0 %v109, 127
    %v119 = vpop.permute.xlu0 %118
    %120 = vrot.lane.b32.xlu0 %v110, 127
    %v121 = vpop.permute.xlu0 %120
    %vm122 = vcmask 1039360
    %v123 = vsel %vm122, %v119, %v121
    %vm126 = vcmask 64512
    %v128 = vsel %vm126, %v114, 0
    %v131 = vsel %vm126, %v115, 0
    %133 = vmatprep.subr.mxu0 0.0
    %134 = vmatpush1.msra.mxu0 0.0
    %135 = vmatprep.subr.mxu0 0.0
    %136 = vmatpush1.msra.mxu0 0.0
    %137 = vmatprep.subr.mxu0 0.0
    %138 = vmatpush1.msra.mxu0 0.0
    %139 = vmatprep.subr.mxu0 0.0
    %140 = vmatpush1.msra.mxu0 0.0
    %141 = vmatprep.subr.mxu0 0.0
    %142 = vmatpush1.msra.mxu0 0.0
    %143 = vmatprep.subr.mxu0 0.0
    %144 = vmatpush1.msra.mxu0 0.0
    %145 = vmatprep.subr.mxu0 0.0
    %146 = vmatpush1.msra.mxu0 0.0
    %147 = vmatprep.subr.mxu0 0.0
    %148 = vmatpush1.msra.mxu0 0.0
    %149 = vmatprep.subr.mxu0 0.0
    %150 = vmatpush1.msra.mxu0 0.0
    %151 = vmatprep.subr.mxu0 0.0
    %152 = vmatpush1.msra.mxu0 0.0
    %153 = vmatprep.subr.mxu0 0.0
    %154 = vmatpush1.msra.mxu0 0.0
    %155 = vmatprep.subr.mxu0 0.0
    %156 = vmatpush1.msra.mxu0 0.0
    %157 = vmatprep.subr.mxu0 0.0
    %158 = vmatpush1.msra.mxu0 0.0
    %159 = vmatprep.subr.mxu0 0.0
    %160 = vmatpush1.msra.mxu0 0.0
    %161 = vmatprep.subr.mxu0 0.0
    %162 = vmatpush1.msra.mxu0 0.0
    %163 = vmatprep.subr.mxu0 %v121
    %164 = vmatpush1.msra.mxu0 %v123
    %165 = vmatprep.subr.mxu0 0.0
    %166 = vmatpush2.msra.mxu0 0.0
    %167 = vmatprep.subr.mxu0 0.0
    %168 = vmatpush2.msra.mxu0 0.0
    %169 = vmatprep.subr.mxu0 0.0
    %170 = vmatpush2.msra.mxu0 0.0
    %171 = vmatprep.subr.mxu0 0.0
    %172 = vmatpush2.msra.mxu0 0.0
    %173 = vmatprep.subr.mxu0 0.0
    %174 = vmatpush2.msra.mxu0 0.0
    %175 = vmatprep.subr.mxu0 0.0
    %176 = vmatpush2.msra.mxu0 0.0
    %177 = vmatprep.subr.mxu0 0.0
    %178 = vmatpush2.msra.mxu0 0.0
    %179 = vmatprep.subr.mxu0 0.0
    %180 = vmatpush2.msra.mxu0 0.0
    %181 = vmatprep.subr.mxu0 0.0
    %182 = vmatpush2.msra.mxu0 0.0
    %183 = vmatprep.subr.mxu0 0.0
    %184 = vmatpush2.msra.mxu0 0.0
    %185 = vmatprep.subr.mxu0 0.0
    %186 = vmatpush2.msra.mxu0 0.0
    %187 = vmatprep.subr.mxu0 0.0
    %188 = vmatpush2.msra.mxu0 0.0
    %189 = vmatprep.subr.mxu0 0.0
    %190 = vmatpush2.msra.mxu0 0.0
    %191 = vmatprep.subr.mxu0 0.0
    %192 = vmatpush2.msra.mxu0 0.0
    %193 = vmatprep.subr.mxu0 0.0
    %194 = vmatpush2.msra.mxu0 0.0
    %195 = vmatprep.subr.mxu0 0.0
    %196 = vmatpush2.msra.mxu0 0.0
    %197 = vmatprep.mubr.f32.mxu0 0.0
    %198 = vmatmul.mubr.f32.gmra.mxu0 %v128
    %v199 = vpop.f32.mrf.mxu0
    %v200 = vadd.f32 0.0, %v199
    %v201 = vpop.f32.mrf.mxu0
    %v202 = vadd.f32 0.0, %v201
    %203 = vmatprep.mubr.f32.mxu0 0.0
    %204 = vmatmul.mubr.f32.gmra.mxu0 %v131
    %v205 = vpop.f32.mrf.mxu0
    %v206 = vadd.f32 0.0, %v205
    %v207 = vpop.f32.mrf.mxu0
    %v208 = vadd.f32 0.0, %v207
    %209 = vdwg.mxu0
    %v211 = vsel %vm126, %v111, 0
    %v214 = vsel %vm126, %v112, 0
    %216 = vmatprep.subr.mxu0 0.0
    %217 = vmatpush1.msra.mxu0 0.0
    %218 = vmatprep.subr.mxu0 0.0
    %219 = vmatpush1.msra.mxu0 0.0
    %220 = vmatprep.subr.mxu0 0.0
    %221 = vmatpush1.msra.mxu0 0.0
    %222 = vmatprep.subr.mxu0 0.0
    %223 = vmatpush1.msra.mxu0 0.0
    %224 = vmatprep.subr.mxu0 0.0
    %225 = vmatpush1.msra.mxu0 0.0
    %226 = vmatprep.subr.mxu0 0.0
    %227 = vmatpush1.msra.mxu0 0.0
    %228 = vmatprep.subr.mxu0 0.0
    %229 = vmatpush1.msra.mxu0 0.0
    %230 = vmatprep.subr.mxu0 0.0
    %231 = vmatpush1.msra.mxu0 0.0
    %232 = vmatprep.subr.mxu0 0.0
    %233 = vmatpush1.msra.mxu0 0.0
    %234 = vmatprep.subr.mxu0 0.0
    %235 = vmatpush1.msra.mxu0 0.0
    %236 = vmatprep.subr.mxu0 0.0
    %237 = vmatpush1.msra.mxu0 0.0
    %238 = vmatprep.subr.mxu0 0.0
    %239 = vmatpush1.msra.mxu0 0.0
    %240 = vmatprep.subr.mxu0 0.0
    %241 = vmatpush1.msra.mxu0 0.0
    %242 = vmatprep.subr.mxu0 0.0
    %243 = vmatpush1.msra.mxu0 0.0
    %244 = vmatprep.subr.mxu0 0.0
    %245 = vmatpush1.msra.mxu0 0.0
    %246 = vmatprep.subr.mxu0 %v110
    %247 = vmatpush1.msra.mxu0 %v109
    %248 = vmatprep.subr.mxu0 0.0
    %249 = vmatpush2.msra.mxu0 0.0
    %250 = vmatprep.subr.mxu0 0.0
    %251 = vmatpush2.msra.mxu0 0.0
    %252 = vmatprep.subr.mxu0 0.0
    %253 = vmatpush2.msra.mxu0 0.0
    %254 = vmatprep.subr.mxu0 0.0
    %255 = vmatpush2.msra.mxu0 0.0
    %256 = vmatprep.subr.mxu0 0.0
    %257 = vmatpush2.msra.mxu0 0.0
    %258 = vmatprep.subr.mxu0 0.0
    %259 = vmatpush2.msra.mxu0 0.0
    %260 = vmatprep.subr.mxu0 0.0
    %261 = vmatpush2.msra.mxu0 0.0
    %262 = vmatprep.subr.mxu0 0.0
    %263 = vmatpush2.msra.mxu0 0.0
    %264 = vmatprep.subr.mxu0 0.0
    %265 = vmatpush2.msra.mxu0 0.0
    %266 = vmatprep.subr.mxu0 0.0
    %267 = vmatpush2.msra.mxu0 0.0
    %268 = vmatprep.subr.mxu0 0.0
    %269 = vmatpush2.msra.mxu0 0.0
    %270 = vmatprep.subr.mxu0 0.0
    %271 = vmatpush2.msra.mxu0 0.0
    %272 = vmatprep.subr.mxu0 0.0
    %273 = vmatpush2.msra.mxu0 0.0
    %274 = vmatprep.subr.mxu0 0.0
    %275 = vmatpush2.msra.mxu0 0.0
    %276 = vmatprep.subr.mxu0 0.0
    %277 = vmatpush2.msra.mxu0 0.0
    %278 = vmatprep.subr.mxu0 0.0
    %279 = vmatpush2.msra.mxu0 0.0
    %280 = vmatprep.mubr.f32.mxu0 0.0
    %281 = vmatmul.mubr.f32.gmra.mxu0 %v211
    %v282 = vpop.f32.mrf.mxu0
    %v283 = vadd.f32 %v200, %v282
    %v284 = vpop.f32.mrf.mxu0
    %v285 = vadd.f32 %v202, %v284
    %286 = vmatprep.mubr.f32.mxu0 0.0
    %287 = vmatmul.mubr.f32.gmra.mxu0 %v214
    %v288 = vpop.f32.mrf.mxu0
    %v289 = vadd.f32 %v206, %v288
    %v290 = vpop.f32.mrf.mxu0
    %v291 = vadd.f32 %v208, %v290
    %292 = vdwg.mxu0
    %s293 = scalar_lea.vmem %s2, 32
    %v294 = vld [vmem:[%s293] sm:$0xff]
    %v295 = vld [vmem:[%s293 + $0x8] sm:$0xff]
    %296 = vrot.lane.b32.xlu0 %v109, 126
    %v297 = vpop.permute.xlu0 %296
    %298 = vrot.lane.b32.xlu0 %v110, 126
    %v299 = vpop.permute.xlu0 %298
    %vm300 = vcmask 1031168
    %v301 = vsel %vm300, %v297, %v299
    %v305 = vsel %vm126, %v294, 0
    %v308 = vsel %vm126, %v295, 0
    %310 = vmatprep.subr.mxu0 0.0
    %311 = vmatpush1.msra.mxu0 0.0
    %312 = vmatprep.subr.mxu0 0.0
    %313 = vmatpush1.msra.mxu0 0.0
    %314 = vmatprep.subr.mxu0 0.0
    %315 = vmatpush1.msra.mxu0 0.0
    %316 = vmatprep.subr.mxu0 0.0
    %317 = vmatpush1.msra.mxu0 0.0
    %318 = vmatprep.subr.mxu0 0.0
    %319 = vmatpush1.msra.mxu0 0.0
    %320 = vmatprep.subr.mxu0 0.0
    %321 = vmatpush1.msra.mxu0 0.0
    %322 = vmatprep.subr.mxu0 0.0
    %323 = vmatpush1.msra.mxu0 0.0
    %324 = vmatprep.subr.mxu0 0.0
    %325 = vmatpush1.msra.mxu0 0.0
    %326 = vmatprep.subr.mxu0 0.0
    %327 = vmatpush1.msra.mxu0 0.0
    %328 = vmatprep.subr.mxu0 0.0
    %329 = vmatpush1.msra.mxu0 0.0
    %330 = vmatprep.subr.mxu0 0.0
    %331 = vmatpush1.msra.mxu0 0.0
    %332 = vmatprep.subr.mxu0 0.0
    %333 = vmatpush1.msra.mxu0 0.0
    %334 = vmatprep.subr.mxu0 0.0
    %335 = vmatpush1.msra.mxu0 0.0
    %336 = vmatprep.subr.mxu0 0.0
    %337 = vmatpush1.msra.mxu0 0.0
    %338 = vmatprep.subr.mxu0 0.0
    %339 = vmatpush1.msra.mxu0 0.0
    %340 = vmatprep.subr.mxu0 %v299
    %341 = vmatpush1.msra.mxu0 %v301
    %342 = vmatprep.subr.mxu0 0.0
    %343 = vmatpush2.msra.mxu0 0.0
    %344 = vmatprep.subr.mxu0 0.0
    %345 = vmatpush2.msra.mxu0 0.0
    %346 = vmatprep.subr.mxu0 0.0
    %347 = vmatpush2.msra.mxu0 0.0
    %348 = vmatprep.subr.mxu0 0.0
    %349 = vmatpush2.msra.mxu0 0.0
    %350 = vmatprep.subr.mxu0 0.0
    %351 = vmatpush2.msra.mxu0 0.0
    %352 = vmatprep.subr.mxu0 0.0
    %353 = vmatpush2.msra.mxu0 0.0
    %354 = vmatprep.subr.mxu0 0.0
    %355 = vmatpush2.msra.mxu0 0.0
    %356 = vmatprep.subr.mxu0 0.0
    %357 = vmatpush2.msra.mxu0 0.0
    %358 = vmatprep.subr.mxu0 0.0
    %359 = vmatpush2.msra.mxu0 0.0
    %360 = vmatprep.subr.mxu0 0.0
    %361 = vmatpush2.msra.mxu0 0.0
    %362 = vmatprep.subr.mxu0 0.0
    %363 = vmatpush2.msra.mxu0 0.0
    %364 = vmatprep.subr.mxu0 0.0
    %365 = vmatpush2.msra.mxu0 0.0
    %366 = vmatprep.subr.mxu0 0.0
    %367 = vmatpush2.msra.mxu0 0.0
    %368 = vmatprep.subr.mxu0 0.0
    %369 = vmatpush2.msra.mxu0 0.0
    %370 = vmatprep.subr.mxu0 0.0
    %371 = vmatpush2.msra.mxu0 0.0
    %372 = vmatprep.subr.mxu0 0.0
    %373 = vmatpush2.msra.mxu0 0.0
    %374 = vmatprep.mubr.f32.mxu0 0.0
    %375 = vmatmul.mubr.f32.gmra.mxu0 %v305
    %v376 = vpop.f32.mrf.mxu0
    %v377 = vadd.f32 0.0, %v376
    %v378 = vpop.f32.mrf.mxu0
    %v379 = vadd.f32 0.0, %v378
    %380 = vmatprep.mubr.f32.mxu0 0.0
    %381 = vmatmul.mubr.f32.gmra.mxu0 %v308
    %v382 = vpop.f32.mrf.mxu0
    %v383 = vadd.f32 0.0, %v382
    %v384 = vpop.f32.mrf.mxu0
    %v385 = vadd.f32 0.0, %v384
    %386 = vdwg.mxu0
    %v387 = vadd.f32 %v283, %v377
    %v388 = vadd.f32 %v285, %v379
    %v389 = vadd.f32 %v289, %v383
    %v390 = vadd.f32 %v291, %v385
    %v391 = vld [vmem:[%s3] sm:$0xff]
    %v392 = vld [vmem:[%s3 + $0x8] sm:$0xff]
    %394 = vset.pattern.permute.xlu0 0
    %395 = vperm.xlu0 %394, %v391
    %v396 = vpop.permute.xlu0 %395
    %399 = vset.pattern.permute.xlu0 0
    %400 = vperm.xlu0 %399, %v392
    %v401 = vpop.permute.xlu0 %400
    %v403 = vmul.f32 %v387, %v396
    %v404 = vmul.f32 %v388, %v396
    %v405 = vmul.f32 %v389, %v401
    %v406 = vmul.f32 %v390, %v401
    %s407 = scalar_lea.vmem %s3, 16
    %v408 = vld [vmem:[%s407] sm:$0xff]
    %v409 = vld [vmem:[%s407 + $0x8] sm:$0xff]
    %411 = vset.pattern.permute.xlu0 0
    %412 = vperm.xlu0 %411, %v408
    %v413 = vpop.permute.xlu0 %412
    %416 = vset.pattern.permute.xlu0 0
    %417 = vperm.xlu0 %416, %v409
    %v418 = vpop.permute.xlu0 %417
    %v420 = vadd.f32 %v403, %v413
    %v421 = vadd.f32 %v404, %v413
    %v422 = vadd.f32 %v405, %v418
    %v423 = vadd.f32 %v406, %v418
    %v424 = vmax.f32 %v420, 0.0
    %v425 = vmax.f32 %v421, 0.0
    %v426 = vmax.f32 %v422, 0.0
    %v427 = vmax.f32 %v423, 0.0
    %v428 = vld [vmem:[%s4] sm:$0xff]
    %v429 = vld [vmem:[%s4 + $0x8] sm:$0xff]
    %s430 = scalar_lea.vmem %s4, 16
    %v431 = vld [vmem:[%s430] sm:$0xff]
    %v432 = vld [vmem:[%s430 + $0x8] sm:$0xff]
    %437 = vrot.lane.b32.xlu0 %v424, 127
    %v438 = vpop.permute.xlu0 %437
    %439 = vrot.lane.b32.xlu0 %v425, 127
    %v440 = vpop.permute.xlu0 %439
    %441 = vrot.lane.b32.xlu0 %v426, 127
    %v442 = vpop.permute.xlu0 %441
    %443 = vrot.lane.b32.xlu0 %v427, 127
    %v444 = vpop.permute.xlu0 %443
    %v445 = vsel %vm122, %v438, %v440
    %v446 = vsel %vm122, %v442, %v444
    %vm449 = vcmask 130048
    %v451 = vsel %vm449, %v431, 0
    %v454 = vsel %vm449, %v432, 0
    %456 = vmatprep.subr.mxu0 0.0
    %457 = vmatpush1.msra.mxu0 0.0
    %458 = vmatprep.subr.mxu0 0.0
    %459 = vmatpush1.msra.mxu0 0.0
    %460 = vmatprep.subr.mxu0 0.0
    %461 = vmatpush1.msra.mxu0 0.0
    %462 = vmatprep.subr.mxu0 0.0
    %463 = vmatpush1.msra.mxu0 0.0
    %464 = vmatprep.subr.mxu0 0.0
    %465 = vmatpush1.msra.mxu0 0.0
    %466 = vmatprep.subr.mxu0 0.0
    %467 = vmatpush1.msra.mxu0 0.0
    %468 = vmatprep.subr.mxu0 0.0
    %469 = vmatpush1.msra.mxu0 0.0
    %470 = vmatprep.subr.mxu0 0.0
    %471 = vmatpush1.msra.mxu0 0.0
    %472 = vmatprep.subr.mxu0 0.0
    %473 = vmatpush1.msra.mxu0 0.0
    %474 = vmatprep.subr.mxu0 0.0
    %475 = vmatpush1.msra.mxu0 0.0
    %476 = vmatprep.subr.mxu0 0.0
    %477 = vmatpush1.msra.mxu0 0.0
    %478 = vmatprep.subr.mxu0 0.0
    %479 = vmatpush1.msra.mxu0 0.0
    %480 = vmatprep.subr.mxu0 0.0
    %481 = vmatpush1.msra.mxu0 0.0
    %482 = vmatprep.subr.mxu0 0.0
    %483 = vmatpush1.msra.mxu0 0.0
    %484 = vmatprep.subr.mxu0 0.0
    %485 = vmatpush1.msra.mxu0 %v446
    %486 = vmatprep.subr.mxu0 0.0
    %487 = vmatpush1.msra.mxu0 %v445
    %488 = vmatprep.subr.mxu0 0.0
    %489 = vmatpush2.msra.mxu0 0.0
    %490 = vmatprep.subr.mxu0 0.0
    %491 = vmatpush2.msra.mxu0 0.0
    %492 = vmatprep.subr.mxu0 0.0
    %493 = vmatpush2.msra.mxu0 0.0
    %494 = vmatprep.subr.mxu0 0.0
    %495 = vmatpush2.msra.mxu0 0.0
    %496 = vmatprep.subr.mxu0 0.0
    %497 = vmatpush2.msra.mxu0 0.0
    %498 = vmatprep.subr.mxu0 0.0
    %499 = vmatpush2.msra.mxu0 0.0
    %500 = vmatprep.subr.mxu0 0.0
    %501 = vmatpush2.msra.mxu0 0.0
    %502 = vmatprep.subr.mxu0 0.0
    %503 = vmatpush2.msra.mxu0 0.0
    %504 = vmatprep.subr.mxu0 0.0
    %505 = vmatpush2.msra.mxu0 0.0
    %506 = vmatprep.subr.mxu0 0.0
    %507 = vmatpush2.msra.mxu0 0.0
    %508 = vmatprep.subr.mxu0 0.0
    %509 = vmatpush2.msra.mxu0 0.0
    %510 = vmatprep.subr.mxu0 0.0
    %511 = vmatpush2.msra.mxu0 0.0
    %512 = vmatprep.subr.mxu0 0.0
    %513 = vmatpush2.msra.mxu0 0.0
    %514 = vmatprep.subr.mxu0 0.0
    %515 = vmatpush2.msra.mxu0 0.0
    %516 = vmatprep.subr.mxu0 0.0
    %517 = vmatpush2.msra.mxu0 0.0
    %518 = vmatprep.subr.mxu0 0.0
    %519 = vmatpush2.msra.mxu0 0.0
    %520 = vmatprep.mubr.f32.mxu0 0.0
    %521 = vmatmul.mubr.f32.gmra.mxu0 %v451
    %v522 = vpop.f32.mrf.mxu0
    %v523 = vadd.f32 0.0, %v522
    %v524 = vpop.f32.mrf.mxu0
    %525 = vmatprep.mubr.f32.mxu0 0.0
    %526 = vmatmul.mubr.f32.gmra.mxu0 %v454
    %v527 = vpop.f32.mrf.mxu0
    %v528 = vadd.f32 0.0, %v527
    %v529 = vpop.f32.mrf.mxu0
    %530 = vdwg.mxu0
    %v532 = vsel %vm449, %v428, 0
    %v535 = vsel %vm449, %v429, 0
    %537 = vmatprep.subr.mxu0 0.0
    %538 = vmatpush1.msra.mxu0 0.0
    %539 = vmatprep.subr.mxu0 0.0
    %540 = vmatpush1.msra.mxu0 0.0
    %541 = vmatprep.subr.mxu0 0.0
    %542 = vmatpush1.msra.mxu0 0.0
    %543 = vmatprep.subr.mxu0 0.0
    %544 = vmatpush1.msra.mxu0 0.0
    %545 = vmatprep.subr.mxu0 0.0
    %546 = vmatpush1.msra.mxu0 0.0
    %547 = vmatprep.subr.mxu0 0.0
    %548 = vmatpush1.msra.mxu0 0.0
    %549 = vmatprep.subr.mxu0 0.0
    %550 = vmatpush1.msra.mxu0 0.0
    %551 = vmatprep.subr.mxu0 0.0
    %552 = vmatpush1.msra.mxu0 0.0
    %553 = vmatprep.subr.mxu0 0.0
    %554 = vmatpush1.msra.mxu0 0.0
    %555 = vmatprep.subr.mxu0 0.0
    %556 = vmatpush1.msra.mxu0 0.0
    %557 = vmatprep.subr.mxu0 0.0
    %558 = vmatpush1.msra.mxu0 0.0
    %559 = vmatprep.subr.mxu0 0.0
    %560 = vmatpush1.msra.mxu0 0.0
    %561 = vmatprep.subr.mxu0 0.0
    %562 = vmatpush1.msra.mxu0 0.0
    %563 = vmatprep.subr.mxu0 0.0
    %564 = vmatpush1.msra.mxu0 0.0
    %565 = vmatprep.subr.mxu0 0.0
    %566 = vmatpush1.msra.mxu0 %v426
    %567 = vmatprep.subr.mxu0 0.0
    %568 = vmatpush1.msra.mxu0 %v424
    %569 = vmatprep.subr.mxu0 0.0
    %570 = vmatpush2.msra.mxu0 0.0
    %571 = vmatprep.subr.mxu0 0.0
    %572 = vmatpush2.msra.mxu0 0.0
    %573 = vmatprep.subr.mxu0 0.0
    %574 = vmatpush2.msra.mxu0 0.0
    %575 = vmatprep.subr.mxu0 0.0
    %576 = vmatpush2.msra.mxu0 0.0
    %577 = vmatprep.subr.mxu0 0.0
    %578 = vmatpush2.msra.mxu0 0.0
    %579 = vmatprep.subr.mxu0 0.0
    %580 = vmatpush2.msra.mxu0 0.0
    %581 = vmatprep.subr.mxu0 0.0
    %582 = vmatpush2.msra.mxu0 0.0
    %583 = vmatprep.subr.mxu0 0.0
    %584 = vmatpush2.msra.mxu0 0.0
    %585 = vmatprep.subr.mxu0 0.0
    %586 = vmatpush2.msra.mxu0 0.0
    %587 = vmatprep.subr.mxu0 0.0
    %588 = vmatpush2.msra.mxu0 0.0
    %589 = vmatprep.subr.mxu0 0.0
    %590 = vmatpush2.msra.mxu0 0.0
    %591 = vmatprep.subr.mxu0 0.0
    %592 = vmatpush2.msra.mxu0 0.0
    %593 = vmatprep.subr.mxu0 0.0
    %594 = vmatpush2.msra.mxu0 0.0
    %595 = vmatprep.subr.mxu0 0.0
    %596 = vmatpush2.msra.mxu0 0.0
    %597 = vmatprep.subr.mxu0 0.0
    %598 = vmatpush2.msra.mxu0 0.0
    %599 = vmatprep.subr.mxu0 0.0
    %600 = vmatpush2.msra.mxu0 0.0
    %601 = vmatprep.mubr.f32.mxu0 0.0
    %602 = vmatmul.mubr.f32.gmra.mxu0 %v532
    %v603 = vpop.f32.mrf.mxu0
    %v604 = vadd.f32 %v523, %v603
    %v605 = vpop.f32.mrf.mxu0
    %606 = vmatprep.mubr.f32.mxu0 0.0
    %607 = vmatmul.mubr.f32.gmra.mxu0 %v535
    %v608 = vpop.f32.mrf.mxu0
    %v609 = vadd.f32 %v528, %v608
    %v610 = vpop.f32.mrf.mxu0
    %611 = vdwg.mxu0
    %s612 = scalar_lea.vmem %s4, 32
    %v613 = vld [vmem:[%s612] sm:$0xff]
    %v614 = vld [vmem:[%s612 + $0x8] sm:$0xff]
    %615 = vrot.lane.b32.xlu0 %v424, 126
    %v616 = vpop.permute.xlu0 %615
    %617 = vrot.lane.b32.xlu0 %v425, 126
    %v618 = vpop.permute.xlu0 %617
    %619 = vrot.lane.b32.xlu0 %v426, 126
    %v620 = vpop.permute.xlu0 %619
    %621 = vrot.lane.b32.xlu0 %v427, 126
    %v622 = vpop.permute.xlu0 %621
    %v623 = vsel %vm300, %v616, %v618
    %v624 = vsel %vm300, %v620, %v622
    %v628 = vsel %vm449, %v613, 0
    %v631 = vsel %vm449, %v614, 0
    %633 = vmatprep.subr.mxu0 0.0
    %634 = vmatpush1.msra.mxu0 0.0
    %635 = vmatprep.subr.mxu0 0.0
    %636 = vmatpush1.msra.mxu0 0.0
    %637 = vmatprep.subr.mxu0 0.0
    %638 = vmatpush1.msra.mxu0 0.0
    %639 = vmatprep.subr.mxu0 0.0
    %640 = vmatpush1.msra.mxu0 0.0
    %641 = vmatprep.subr.mxu0 0.0
    %642 = vmatpush1.msra.mxu0 0.0
    %643 = vmatprep.subr.mxu0 0.0
    %644 = vmatpush1.msra.mxu0 0.0
    %645 = vmatprep.subr.mxu0 0.0
    %646 = vmatpush1.msra.mxu0 0.0
    %647 = vmatprep.subr.mxu0 0.0
    %648 = vmatpush1.msra.mxu0 0.0
    %649 = vmatprep.subr.mxu0 0.0
    %650 = vmatpush1.msra.mxu0 0.0
    %651 = vmatprep.subr.mxu0 0.0
    %652 = vmatpush1.msra.mxu0 0.0
    %653 = vmatprep.subr.mxu0 0.0
    %654 = vmatpush1.msra.mxu0 0.0
    %655 = vmatprep.subr.mxu0 0.0
    %656 = vmatpush1.msra.mxu0 0.0
    %657 = vmatprep.subr.mxu0 0.0
    %658 = vmatpush1.msra.mxu0 0.0
    %659 = vmatprep.subr.mxu0 0.0
    %660 = vmatpush1.msra.mxu0 0.0
    %661 = vmatprep.subr.mxu0 0.0
    %662 = vmatpush1.msra.mxu0 %v624
    %663 = vmatprep.subr.mxu0 0.0
    %664 = vmatpush1.msra.mxu0 %v623
    %665 = vmatprep.subr.mxu0 0.0
    %666 = vmatpush2.msra.mxu0 0.0
    %667 = vmatprep.subr.mxu0 0.0
    %668 = vmatpush2.msra.mxu0 0.0
    %669 = vmatprep.subr.mxu0 0.0
    %670 = vmatpush2.msra.mxu0 0.0
    %671 = vmatprep.subr.mxu0 0.0
    %672 = vmatpush2.msra.mxu0 0.0
    %673 = vmatprep.subr.mxu0 0.0
    %674 = vmatpush2.msra.mxu0 0.0
    %675 = vmatprep.subr.mxu0 0.0
    %676 = vmatpush2.msra.mxu0 0.0
    %677 = vmatprep.subr.mxu0 0.0
    %678 = vmatpush2.msra.mxu0 0.0
    %679 = vmatprep.subr.mxu0 0.0
    %680 = vmatpush2.msra.mxu0 0.0
    %681 = vmatprep.subr.mxu0 0.0
    %682 = vmatpush2.msra.mxu0 0.0
    %683 = vmatprep.subr.mxu0 0.0
    %684 = vmatpush2.msra.mxu0 0.0
    %685 = vmatprep.subr.mxu0 0.0
    %686 = vmatpush2.msra.mxu0 0.0
    %687 = vmatprep.subr.mxu0 0.0
    %688 = vmatpush2.msra.mxu0 0.0
    %689 = vmatprep.subr.mxu0 0.0
    %690 = vmatpush2.msra.mxu0 0.0
    %691 = vmatprep.subr.mxu0 0.0
    %692 = vmatpush2.msra.mxu0 0.0
    %693 = vmatprep.subr.mxu0 0.0
    %694 = vmatpush2.msra.mxu0 0.0
    %695 = vmatprep.subr.mxu0 0.0
    %696 = vmatpush2.msra.mxu0 0.0
    %697 = vmatprep.mubr.f32.mxu0 0.0
    %698 = vmatmul.mubr.f32.gmra.mxu0 %v628
    %v699 = vpop.f32.mrf.mxu0
    %v700 = vadd.f32 0.0, %v699
    %v701 = vpop.f32.mrf.mxu0
    %702 = vmatprep.mubr.f32.mxu0 0.0
    %703 = vmatmul.mubr.f32.gmra.mxu0 %v631
    %v704 = vpop.f32.mrf.mxu0
    %v705 = vadd.f32 0.0, %v704
    %v706 = vpop.f32.mrf.mxu0
    %707 = vdwg.mxu0
    %v708 = vadd.f32 %v604, %v700
    %v709 = vadd.f32 %v609, %v705
    %710 = vst [vmem:[%s5] sm:$0xff] %v708
    %711 = vst [vmem:[%s5 + $0x8] sm:$0xff] %v709
    %p712 = scmp.eq.s32.totalorder 0, 0
    %p713 = scmp.eq.s32.totalorder 0, 0
    %p714 = pnand %p712, %p713
    %p715 = pneg %p714
    // Predicated region
    $region98: #{down_scale.3} parent=1 // pred_check
      _
    $region99: #{down_scale.3} parent=1 // pred_check_branch
      %717 = sbr.rel (%p714) target = $region101
    $region100: #{down_scale.3} parent=1 // pred_region
      %718 = vst [vmem:[%s6] sm:$0xff] 0.0
      %719 = vst [vmem:[%s6 + $0x8] sm:$0xff] 0.0
      %720 = vst [vmem:[%s7] sm:$0xff] 0.0
      %721 = vst [vmem:[%s7 + $0x8] sm:$0xff] 0.0
    $region101: #{down_scale.3} parent=1 // pred_fallthru
      _
    %p722 = scmp.lt.s32.totalorder 0, 0
    // Predicated region
    $region102: #{down_scale.3} parent=1 // pred_check
      %p723 = pneg %p722
    $region103: #{down_scale.3} parent=1 // pred_check_branch
      %725 = sbr.rel (%p723) target = $region105
    $region104: #{down_scale.3} parent=1 // pred_region
      %v726 = vld [vmem:[%s6] sm:$0xff]
      %v727 = vld [vmem:[%s6 + $0x8] sm:$0xff]
      %v728 = vadd.f32 %v726, %v708
      %v729 = vadd.f32 %v727, %v709
      %730 = vst [vmem:[%s6] sm:$0xff] %v728
      %731 = vst [vmem:[%s6 + $0x8] sm:$0xff] %v729
      %v732 = vld [vmem:[%s7] sm:$0xff]
      %v733 = vld [vmem:[%s7 + $0x8] sm:$0xff]
      %v734 = vmul.f32 %v708, %v708
      %v735 = vmul.f32 %v709, %v709
      %v736 = vadd.f32 %v732, %v734
      %v737 = vadd.f32 %v733, %v735
      %738 = vst [vmem:[%s7] sm:$0xff] %v736
      %739 = vst [vmem:[%s7 + $0x8] sm:$0xff] %v737
    $region105: #{down_scale.3} parent=1 // pred_fallthru
      _
    // Predicated region
    $region106: #{down_scale.3} parent=1 // pred_check
      %p740 = pneg %p713
    $region107: #{down_scale.3} parent=1 // pred_check_branch
      %742 = sbr.rel (%p740) target = $region109
    $region108: #{down_scale.3} parent=1 // pred_region
      %v743 = vlaneseq
      %v744 = vand.u32 %v743, 127
      %vm745 = vcmp.lt.s32.totalorder %v744, 4
      %v746 = vsel %vm745, 1, 0
      %vm747 = vcmp.eq.s32.totalorder %v746, 1
      %v748 = vsel %vm747, %v708, 0.0
      %v749 = vsel %vm747, %v709, 0.0
      %v750 = vld [vmem:[%s6] sm:$0xff]
      %v751 = vld [vmem:[%s6 + $0x8] sm:$0xff]
      %v752 = vadd.f32 %v750, %v748
      %v753 = vadd.f32 %v751, %v749
      %754 = vst [vmem:[%s6] sm:$0xff] %v752
      %755 = vst [vmem:[%s6 + $0x8] sm:$0xff] %v753
      %v756 = vld [vmem:[%s7] sm:$0xff]
      %v757 = vld [vmem:[%s7 + $0x8] sm:$0xff]
      %v758 = vmul.f32 %v748, %v748
      %v759 = vmul.f32 %v749, %v749
      %v760 = vadd.f32 %v756, %v758
      %v761 = vadd.f32 %v757, %v759
      %762 = vst [vmem:[%s7] sm:$0xff] %v760
      %763 = vst [vmem:[%s7 + $0x8] sm:$0xff] %v761
    $region109: #{down_scale.3} parent=1 // pred_fallthru
      _
    // Predicated region
    $region110: #{down_scale.3} parent=1 // pred_check
      _
    $region111: #{down_scale.3} parent=1 // pred_check_branch
      %765 = sbr.rel (0) target = $region113
    $region112: #{down_scale.3} parent=1 // pred_region
      _
    $region113: #{down_scale.3} parent=1 // pred_fallthru
      _
    // Predicated region
    $region114: #{down_scale.3} parent=1 // pred_check
      _
    $region115: #{down_scale.3} parent=1 // pred_check_branch
      %767 = sbr.rel (0) target = $region117
    $region116: #{down_scale.3} parent=1 // pred_region
      _
    $region117: #{down_scale.3} parent=1 // pred_fallthru
      _
    // Predicated region
    $region118: #{down_scale.3} parent=1 // pred_check
      _
    $region119: #{down_scale.3} parent=1 // pred_check_branch
      %769 = sbr.rel (0) target = $region121
    $region120: #{down_scale.3} parent=1 // pred_region
      _
    $region121: #{down_scale.3} parent=1 // pred_fallthru
      _
    // Predicated region
    $region122: #{down_scale.3} parent=1 // pred_check
      _
    $region123: #{down_scale.3} parent=1 // pred_check_branch
      %771 = sbr.rel (0) target = $region125
    $region124: #{down_scale.3} parent=1 // pred_region
      _
    $region125: #{down_scale.3} parent=1 // pred_fallthru
      _
    // Predicated region
    $region126: #{down_scale.3} parent=1 // pred_check
      _
    $region127: #{down_scale.3} parent=1 // pred_check_branch
      %773 = sbr.rel (0) target = $region129
    $region128: #{down_scale.3} parent=1 // pred_region
      _
    $region129: #{down_scale.3} parent=1 // pred_fallthru
      _
    // Predicated region
    $region130: #{down_scale.3} parent=1 // pred_check
      _
    $region131: #{down_scale.3} parent=1 // pred_check_branch
      %775 = sbr.rel (0) target = $region133
    $region132: #{down_scale.3} parent=1 // pred_region
      _
    $region133: #{down_scale.3} parent=1 // pred_fallthru
      _

</llo_original>
